<compile_context>
chip_gen: v7x
topology: tpu7x:2x2x1
jax: 0.10.0
libtpu: 0.0.40
codegen_flags: <defaults>
</compile_context>

<pallas_src>
import jax
import jax.numpy as jnp
from jax.experimental import pallas as pl
from jax.experimental.pallas import tpu as pltpu

HIDDEN = 1024   # reID feature dim fixed by the module (Linear(1024, n))
LANE = 128      # TPU lane width
CHUNK = 256     # hidden-dim chunk size inside the kernel


def _round_up(v, m):
    return ((v + m - 1) // m) * m


# ----------------------------- Pallas kernel --------------------------------
def _reid_fwd_kernel(x_ref, wh_ref, bh_ref, wn_ref, bn_ref, out_ref):
    """Fused head (Linear+ReLU) and classifier (Linear) on one batch tile.

    x_ref  : (TILE_B, D_in)   f32 input tile (cast to bf16 in-kernel)
    wh_ref : (D_in, 1024)     bf16 head weight        (grid-invariant)
    bh_ref : (1, 1024)        f32 head bias           (grid-invariant)
    wn_ref : (1024, n_pad)    bf16 classifier weight  (grid-invariant, 0-padded)
    bn_ref : (1, n_pad)       f32 classifier bias     (grid-invariant, 0-padded)
    out_ref: (TILE_B, n_pad)  f32 logits (lane-dense, n_pad multiple of 128)
    """
    x = x_ref[...].astype(jnp.bfloat16)            # in-kernel MXU-input cast
    acc = jnp.zeros(out_ref.shape, jnp.float32)
    # Chunk the hidden dim: chunk k's second matmul (MXU) overlaps chunk k+1's
    # bias+ReLU+cast epilogue (VPU), and the live feat slab is only TILE_Bx256.
    for k in range(0, HIDDEN, CHUNK):              # static, unrolled (4 chunks)
        feat = jnp.dot(x, wh_ref[:, k:k + CHUNK],
                       preferred_element_type=jnp.float32)
        feat = jnp.maximum(feat + bh_ref[:, k:k + CHUNK], 0.0)
        acc = acc + jnp.dot(feat.astype(jnp.bfloat16), wn_ref[k:k + CHUNK, :],
                            preferred_element_type=jnp.float32)
    out_ref[...] = acc + bn_ref[...]


# ------------------------------- wrapper -------------------------------------
# Lazily resolved pipeline mode for the grid-invariant operands:
# [] = unresolved, [mode] once a launch has succeeded with that mode.
_RESIDENT_MODE = []


def _make_specs(tile_b, d_in, n_pad, resident_mode):
    if resident_mode is None:
        def res(shape):
            return pl.BlockSpec(shape, lambda i: (0, 0))
    else:
        def res(shape):
            return pl.BlockSpec(shape, lambda i: (0, 0),
                                pipeline_mode=resident_mode)
    in_specs = [
        pl.BlockSpec((tile_b, d_in), lambda i: (i, 0)),    # x tile (pipelined)
        res((d_in, HIDDEN)),                               # Wh  (resident)
        res((1, HIDDEN)),                                  # bh  (resident)
        res((HIDDEN, n_pad)),                              # Wn  (resident)
        res((1, n_pad)),                                    # bn  (resident)
    ]
    out_spec = pl.BlockSpec((tile_b, n_pad), lambda i: (i, 0))
    return in_specs, out_spec


def _choose_tile_b(batch):
    """Batch tile: >= 2 grid steps when possible (v7x's two TCs both work),
    capped at 256 rows (fills v6e/v7x MXU M dim), multiples of 16 rows."""
    if batch <= 16:
        return batch                      # single block == full batch dim
    return min(256, _round_up(pl.cdiv(batch, 2), 16))


def reid_forward(x, prepared, nways):
    """reID_Model.forward(x, nways): head(x) then last_{nways}(feat)."""
    wh_bf = prepared["head_w_bf16"]
    bh = prepared["head_b"]
    wn_bf, bn_p, n = prepared[f"last_{nways}"]

    B, d_in = x.shape
    n_pad = wn_bf.shape[1]

    tile_b = _choose_tile_b(B)
    grid = (pl.cdiv(B, tile_b),)

    cost = pl.CostEstimate(
        flops=2 * B * HIDDEN * (d_in + n_pad),
        transcendentals=0,
        bytes_accessed=int(x.size * 4 + wh_bf.size * 2 + bh.size * 4
                           + wn_bf.size * 2 + bn_p.size * 4 + B * n_pad * 4),
    )

    if _RESIDENT_MODE:
        modes = [_RESIDENT_MODE[0]]
    else:
        modes = ([pl.Buffered(1)] if hasattr(pl, "Buffered") else []) + [None]

    last_err = None
    for mode in modes:
        try:
            in_specs, out_spec = _make_specs(tile_b, d_in, n_pad, mode)
            out = pl.pallas_call(
                _reid_fwd_kernel,
                out_shape=jax.ShapeDtypeStruct((B, n_pad), jnp.float32),
                grid=grid,
                in_specs=in_specs,
                out_specs=out_spec,
                compiler_params=pltpu.CompilerParams(
                    dimension_semantics=("parallel",)),
                cost_estimate=cost,
            )(x, wh_bf, bh, wn_bf, bn_p)
        except Exception as e:            # fall back to default double-buffering
            last_err = e
            continue
        if not _RESIDENT_MODE:
            _RESIDENT_MODE.append(mode)
        # strip the zero-filled lane padding of the classifier output
        return out[:, :n]
    raise last_err


# ------------------------- deterministic parameters --------------------------
def init_params(key, d_in, n_list):
    """PyTorch-Linear-style uniform(+-1/sqrt(fan_in)) init, deterministic.
    Master weights stay f32."""
    params = {}
    k_hw, k_hb, key = jax.random.split(key, 3)
    bound_h = 1.0 / jnp.sqrt(jnp.float32(d_in))
    params["head_w"] = jax.random.uniform(
        k_hw, (d_in, HIDDEN), jnp.float32, -bound_h, bound_h)
    params["head_b"] = jax.random.uniform(
        k_hb, (1, HIDDEN), jnp.float32, -bound_h, bound_h)

    bound_l = 1.0 / jnp.sqrt(jnp.float32(HIDDEN))
    for n in n_list:
        k_w, k_b, key = jax.random.split(key, 3)
        params[f"last_{n}_w"] = jax.random.uniform(
            k_w, (HIDDEN, n), jnp.float32, -bound_l, bound_l)
        params[f"last_{n}_b"] = jax.random.uniform(
            k_b, (1, n), jnp.float32, -bound_l, bound_l)
    return params


def prepare_params(params, n_list):
    """One-time inference prep (hoisted out of reid_forward): bf16 casts for
    the MXU path and lane-padding of each classifier head to a multiple of 128.
    Only per-batch work happens per forward call."""
    prep = {
        "head_w_bf16": params["head_w"].astype(jnp.bfloat16),
        "head_b": params["head_b"],                      # f32 epilogue
    }
    for n in n_list:
        n_pad = max(LANE, _round_up(n, LANE))
        wn = jnp.pad(params[f"last_{n}_w"], ((0, 0), (0, n_pad - n)))
        bn = jnp.pad(params[f"last_{n}_b"], ((0, 0), (0, n_pad - n)))
        prep[f"last_{n}"] = (wn.astype(jnp.bfloat16), bn, n)
    return prep


def reid_forward_ref(x, params, nways):
    """Pure-JAX reference matching the kernel's numerics (bf16 MXU inputs,
    f32 accumulation and epilogue)."""
    bf = lambda a: a.astype(jnp.bfloat16)
    feat = jnp.dot(bf(x), bf(params["head_w"]),
                   preferred_element_type=jnp.float32)
    feat = jnp.maximum(feat + params["head_b"], 0.0)
    logits = jnp.dot(bf(feat), bf(params[f"last_{nways}_w"]),
                     preferred_element_type=jnp.float32)
    return logits + params[f"last_{nways}_b"]


# ----------------------------------- main ------------------------------------
if __name__ == "__main__":
    key = jax.random.PRNGKey(0)
    k_x, k_x2, k_p = jax.random.split(key, 3)

    D_in = 32                # pre-head feature dim of the synthetic head
    n_list = [5, 10]         # reID classification heads (last_5, last_10)
    params = init_params(k_p, D_in, n_list)
    prepared = prepare_params(params, n_list)   # one-time weight prep

    # small batch (single-tile path), nways=5
    B = 8
    x = jax.random.normal(k_x, (B, D_in), jnp.float32)
    logits = jax.block_until_ready(reid_forward(x, prepared, 5))
    ref = reid_forward_ref(x, params, 5)
    assert logits.shape == (B, 5)
    assert jnp.allclose(logits, ref, atol=1e-2, rtol=1e-2), "mismatch (B=8)"

    # larger batch (multi-tile, parallel-grid path) with the other head
    B2 = 256
    x2 = jax.random.normal(k_x2, (B2, D_in), jnp.float32)
    logits2 = jax.block_until_ready(reid_forward(x2, prepared, 10))
    ref2 = reid_forward_ref(x2, params, 10)
    assert logits2.shape == (B2, 10)
    assert jnp.allclose(logits2, ref2, atol=1e-2, rtol=1e-2), "mismatch (B=256)"

    print("KERNEL_OK")
</pallas_src>

<mosaic_0001>
module attributes {stable_mosaic.version = 11 : i64} {
  func.func @_reid_fwd_kernel(%arg0: i32, %arg1: memref<8x32xf32, #tpu.memory_space<vmem>>, %arg2: memref<32x1024xbf16, #tpu.memory_space<vmem>>, %arg3: memref<1x1024xf32, #tpu.memory_space<vmem>>, %arg4: memref<1024x128xbf16, #tpu.memory_space<vmem>>, %arg5: memref<1x128xf32, #tpu.memory_space<vmem>>, %arg6: memref<8x128xf32, #tpu.memory_space<vmem>>) attributes {dimension_semantics = [#tpu.dimension_semantics<parallel>], iteration_bounds = array<i64: 1>, scalar_prefetch = 0 : i64, scratch_operands = 0 : i64, tpu.core_type = #tpu.core_type<tc>, window_params = [{transform_indices = @transform_0, window_bounds = array<i64: 8, 32>}, {pipeline_mode = #tpu.pipeline_mode<synchronous>, transform_indices = @transform_1, window_bounds = array<i64: 32, 1024>}, {pipeline_mode = #tpu.pipeline_mode<synchronous>, transform_indices = @transform_2, window_bounds = array<i64: 1, 1024>}, {pipeline_mode = #tpu.pipeline_mode<synchronous>, transform_indices = @transform_3, window_bounds = array<i64: 1024, 128>}, {pipeline_mode = #tpu.pipeline_mode<synchronous>, transform_indices = @transform_4, window_bounds = array<i64: 1, 128>}, {transform_indices = @transform_5, window_bounds = array<i64: 8, 128>}]} {
    %c0 = arith.constant 0 : index
    %c0_0 = arith.constant 0 : index
    %0 = vector.load %arg1[%c0, %c0_0] : memref<8x32xf32, #tpu.memory_space<vmem>>, vector<8x32xf32>
    %1 = arith.truncf %0 : vector<8x32xf32> to vector<8x32xbf16>
    %cst = arith.constant 0.000000e+00 : f32
    %2 = vector.broadcast %cst : f32 to vector<8x128xf32>
    %c0_1 = arith.constant 0 : index
    %c0_2 = arith.constant 0 : index
    %3 = vector.load %arg2[%c0_1, %c0_2] : memref<32x1024xbf16, #tpu.memory_space<vmem>>, vector<32x256xbf16>
    %cst_3 = arith.constant dense<0.000000e+00> : vector<8x256xf32>
    %4 = tpu.matmul %1, %3, %cst_3 {dimension_numbers = #tpu.dot_dimension_numbers<[1], [0], [0], [1], [0, 0, 1, 1], [], []>} : vector<8x32xbf16>, vector<32x256xbf16>, vector<8x256xf32> -> vector<8x256xf32>
    %c0_4 = arith.constant 0 : index
    %c0_5 = arith.constant 0 : index
    %5 = vector.load %arg3[%c0_4, %c0_5] : memref<1x1024xf32, #tpu.memory_space<vmem>>, vector<1x256xf32>
    %6 = vector.broadcast %5 : vector<1x256xf32> to vector<8x256xf32>
    %7 = arith.addf %4, %6 : vector<8x256xf32>
    %cst_6 = arith.constant 0.000000e+00 : f32
    %8 = vector.broadcast %cst_6 : f32 to vector<8x256xf32>
    %9 = arith.maximumf %7, %8 : vector<8x256xf32>
    %10 = arith.truncf %9 : vector<8x256xf32> to vector<8x256xbf16>
    %c0_7 = arith.constant 0 : index
    %c0_8 = arith.constant 0 : index
    %11 = vector.load %arg4[%c0_7, %c0_8] : memref<1024x128xbf16, #tpu.memory_space<vmem>>, vector<256x128xbf16>
    %cst_9 = arith.constant dense<0.000000e+00> : vector<8x128xf32>
    %12 = tpu.matmul %10, %11, %cst_9 {dimension_numbers = #tpu.dot_dimension_numbers<[1], [0], [0], [1], [0, 0, 1, 1], [], []>} : vector<8x256xbf16>, vector<256x128xbf16>, vector<8x128xf32> -> vector<8x128xf32>
    %13 = arith.addf %2, %12 : vector<8x128xf32>
    %c0_10 = arith.constant 0 : index
    %c256 = arith.constant 256 : index
    %14 = vector.load %arg2[%c0_10, %c256] : memref<32x1024xbf16, #tpu.memory_space<vmem>>, vector<32x256xbf16>
    %cst_11 = arith.constant dense<0.000000e+00> : vector<8x256xf32>
    %15 = tpu.matmul %1, %14, %cst_11 {dimension_numbers = #tpu.dot_dimension_numbers<[1], [0], [0], [1], [0, 0, 1, 1], [], []>} : vector<8x32xbf16>, vector<32x256xbf16>, vector<8x256xf32> -> vector<8x256xf32>
    %c0_12 = arith.constant 0 : index
    %c256_13 = arith.constant 256 : index
    %16 = vector.load %arg3[%c0_12, %c256_13] : memref<1x1024xf32, #tpu.memory_space<vmem>>, vector<1x256xf32>
    %17 = vector.broadcast %16 : vector<1x256xf32> to vector<8x256xf32>
    %18 = arith.addf %15, %17 : vector<8x256xf32>
    %cst_14 = arith.constant 0.000000e+00 : f32
    %19 = vector.broadcast %cst_14 : f32 to vector<8x256xf32>
    %20 = arith.maximumf %18, %19 : vector<8x256xf32>
    %21 = arith.truncf %20 : vector<8x256xf32> to vector<8x256xbf16>
    %c256_15 = arith.constant 256 : index
    %c0_16 = arith.constant 0 : index
    %22 = vector.load %arg4[%c256_15, %c0_16] : memref<1024x128xbf16, #tpu.memory_space<vmem>>, vector<256x128xbf16>
    %cst_17 = arith.constant dense<0.000000e+00> : vector<8x128xf32>
    %23 = tpu.matmul %21, %22, %cst_17 {dimension_numbers = #tpu.dot_dimension_numbers<[1], [0], [0], [1], [0, 0, 1, 1], [], []>} : vector<8x256xbf16>, vector<256x128xbf16>, vector<8x128xf32> -> vector<8x128xf32>
    %24 = arith.addf %13, %23 : vector<8x128xf32>
    %c0_18 = arith.constant 0 : index
    %c512 = arith.constant 512 : index
    %25 = vector.load %arg2[%c0_18, %c512] : memref<32x1024xbf16, #tpu.memory_space<vmem>>, vector<32x256xbf16>
    %cst_19 = arith.constant dense<0.000000e+00> : vector<8x256xf32>
    %26 = tpu.matmul %1, %25, %cst_19 {dimension_numbers = #tpu.dot_dimension_numbers<[1], [0], [0], [1], [0, 0, 1, 1], [], []>} : vector<8x32xbf16>, vector<32x256xbf16>, vector<8x256xf32> -> vector<8x256xf32>
    %c0_20 = arith.constant 0 : index
    %c512_21 = arith.constant 512 : index
    %27 = vector.load %arg3[%c0_20, %c512_21] : memref<1x1024xf32, #tpu.memory_space<vmem>>, vector<1x256xf32>
    %28 = vector.broadcast %27 : vector<1x256xf32> to vector<8x256xf32>
    %29 = arith.addf %26, %28 : vector<8x256xf32>
    %cst_22 = arith.constant 0.000000e+00 : f32
    %30 = vector.broadcast %cst_22 : f32 to vector<8x256xf32>
    %31 = arith.maximumf %29, %30 : vector<8x256xf32>
    %32 = arith.truncf %31 : vector<8x256xf32> to vector<8x256xbf16>
    %c512_23 = arith.constant 512 : index
    %c0_24 = arith.constant 0 : index
    %33 = vector.load %arg4[%c512_23, %c0_24] : memref<1024x128xbf16, #tpu.memory_space<vmem>>, vector<256x128xbf16>
    %cst_25 = arith.constant dense<0.000000e+00> : vector<8x128xf32>
    %34 = tpu.matmul %32, %33, %cst_25 {dimension_numbers = #tpu.dot_dimension_numbers<[1], [0], [0], [1], [0, 0, 1, 1], [], []>} : vector<8x256xbf16>, vector<256x128xbf16>, vector<8x128xf32> -> vector<8x128xf32>
    %35 = arith.addf %24, %34 : vector<8x128xf32>
    %c0_26 = arith.constant 0 : index
    %c768 = arith.constant 768 : index
    %36 = vector.load %arg2[%c0_26, %c768] : memref<32x1024xbf16, #tpu.memory_space<vmem>>, vector<32x256xbf16>
    %cst_27 = arith.constant dense<0.000000e+00> : vector<8x256xf32>
    %37 = tpu.matmul %1, %36, %cst_27 {dimension_numbers = #tpu.dot_dimension_numbers<[1], [0], [0], [1], [0, 0, 1, 1], [], []>} : vector<8x32xbf16>, vector<32x256xbf16>, vector<8x256xf32> -> vector<8x256xf32>
    %c0_28 = arith.constant 0 : index
    %c768_29 = arith.constant 768 : index
    %38 = vector.load %arg3[%c0_28, %c768_29] : memref<1x1024xf32, #tpu.memory_space<vmem>>, vector<1x256xf32>
    %39 = vector.broadcast %38 : vector<1x256xf32> to vector<8x256xf32>
    %40 = arith.addf %37, %39 : vector<8x256xf32>
    %cst_30 = arith.constant 0.000000e+00 : f32
    %41 = vector.broadcast %cst_30 : f32 to vector<8x256xf32>
    %42 = arith.maximumf %40, %41 : vector<8x256xf32>
    %43 = arith.truncf %42 : vector<8x256xf32> to vector<8x256xbf16>
    %c768_31 = arith.constant 768 : index
    %c0_32 = arith.constant 0 : index
    %44 = vector.load %arg4[%c768_31, %c0_32] : memref<1024x128xbf16, #tpu.memory_space<vmem>>, vector<256x128xbf16>
    %cst_33 = arith.constant dense<0.000000e+00> : vector<8x128xf32>
    %45 = tpu.matmul %43, %44, %cst_33 {dimension_numbers = #tpu.dot_dimension_numbers<[1], [0], [0], [1], [0, 0, 1, 1], [], []>} : vector<8x256xbf16>, vector<256x128xbf16>, vector<8x128xf32> -> vector<8x128xf32>
    %46 = arith.addf %35, %45 : vector<8x128xf32>
    %c0_34 = arith.constant 0 : index
    %c0_35 = arith.constant 0 : index
    %47 = vector.load %arg5[%c0_34, %c0_35] : memref<1x128xf32, #tpu.memory_space<vmem>>, vector<1x128xf32>
    %48 = vector.broadcast %47 : vector<1x128xf32> to vector<8x128xf32>
    %49 = arith.addf %46, %48 : vector<8x128xf32>
    %c0_36 = arith.constant 0 : index
    %c0_37 = arith.constant 0 : index
    %50 = vector.load %arg6[%c0_36, %c0_37] : memref<8x128xf32, #tpu.memory_space<vmem>>, vector<8x128xf32>
    tpu.vector_store %arg6[%c0_36, %c0_37], %49 {strides = array<i32>} : memref<8x128xf32, #tpu.memory_space<vmem>>, vector<8x128xf32>,
    return
  }
  func.func @transform_0(%arg0: i32) -> (i32, i32) {
    %c0_i32 = arith.constant 0 : i32
    %c0_i32_0 = arith.constant 0 : i32
    return %arg0, %c0_i32 : i32, i32
  }
  func.func @transform_1(%arg0: i32) -> (i32, i32) {
    %c0_i32 = arith.constant 0 : i32
    %c0_i32_0 = arith.constant 0 : i32
    %c0_i32_1 = arith.constant 0 : i32
    return %c0_i32, %c0_i32_0 : i32, i32
  }
  func.func @transform_2(%arg0: i32) -> (i32, i32) {
    %c0_i32 = arith.constant 0 : i32
    %c0_i32_0 = arith.constant 0 : i32
    %c0_i32_1 = arith.constant 0 : i32
    return %c0_i32, %c0_i32_0 : i32, i32
  }
  func.func @transform_3(%arg0: i32) -> (i32, i32) {
    %c0_i32 = arith.constant 0 : i32
    %c0_i32_0 = arith.constant 0 : i32
    %c0_i32_1 = arith.constant 0 : i32
    return %c0_i32, %c0_i32_0 : i32, i32
  }
  func.func @transform_4(%arg0: i32) -> (i32, i32) {
    %c0_i32 = arith.constant 0 : i32
    %c0_i32_0 = arith.constant 0 : i32
    %c0_i32_1 = arith.constant 0 : i32
    return %c0_i32, %c0_i32_0 : i32, i32
  }
  func.func @transform_5(%arg0: i32) -> (i32, i32) {
    %c0_i32 = arith.constant 0 : i32
    %c0_i32_0 = arith.constant 0 : i32
    return %arg0, %c0_i32 : i32, i32
  }
}

module attributes {stable_mosaic.version = 11 : i64} {
  func.func @_reid_fwd_kernel(%arg0: i32, %arg1: memref<8x32xf32, #tpu.memory_space<vmem>>, %arg2: memref<32x1024xbf16, #tpu.memory_space<vmem>>, %arg3: memref<1x1024xf32, #tpu.memory_space<vmem>>, %arg4: memref<1024x128xbf16, #tpu.memory_space<vmem>>, %arg5: memref<1x128xf32, #tpu.memory_space<vmem>>, %arg6: memref<8x128xf32, #tpu.memory_space<vmem>>) attributes {dimension_semantics = [#tpu.dimension_semantics<parallel>], iteration_bounds = array<i64: 1>, scalar_prefetch = 0 : i64, scratch_operands = 0 : i64, tpu.core_type = #tpu.core_type<tc>, window_params = [{transform_indices = @transform_0, window_bounds = array<i64: 8, 32>}, {pipeline_mode = #tpu.pipeline_mode<synchronous>, transform_indices = @transform_1, window_bounds = array<i64: 32, 1024>}, {pipeline_mode = #tpu.pipeline_mode<synchronous>, transform_indices = @transform_2, window_bounds = array<i64: 1, 1024>}, {pipeline_mode = #tpu.pipeline_mode<synchronous>, transform_indices = @transform_3, window_bounds = array<i64: 1024, 128>}, {pipeline_mode = #tpu.pipeline_mode<synchronous>, transform_indices = @transform_4, window_bounds = array<i64: 1, 128>}, {transform_indices = @transform_5, window_bounds = array<i64: 8, 128>}]} {
    %c0 = arith.constant 0 : index
    %c0_0 = arith.constant 0 : index
    %0 = vector.load %arg1[%c0, %c0_0] : memref<8x32xf32, #tpu.memory_space<vmem>>, vector<8x32xf32>
    %1 = arith.truncf %0 : vector<8x32xf32> to vector<8x32xbf16>
    %cst = arith.constant 0.000000e+00 : f32
    %2 = vector.broadcast %cst : f32 to vector<8x128xf32>
    %c0_1 = arith.constant 0 : index
    %c0_2 = arith.constant 0 : index
    %3 = vector.load %arg2[%c0_1, %c0_2] : memref<32x1024xbf16, #tpu.memory_space<vmem>>, vector<32x256xbf16>
    %cst_3 = arith.constant dense<0.000000e+00> : vector<8x256xf32>
    %4 = tpu.matmul %1, %3, %cst_3 {dimension_numbers = #tpu.dot_dimension_numbers<[1], [0], [0], [1], [0, 0, 1, 1], [], []>} : vector<8x32xbf16>, vector<32x256xbf16>, vector<8x256xf32> -> vector<8x256xf32>
    %c0_4 = arith.constant 0 : index
    %c0_5 = arith.constant 0 : index
    %5 = vector.load %arg3[%c0_4, %c0_5] : memref<1x1024xf32, #tpu.memory_space<vmem>>, vector<1x256xf32>
    %6 = vector.broadcast %5 : vector<1x256xf32> to vector<8x256xf32>
    %7 = arith.addf %4, %6 : vector<8x256xf32>
    %cst_6 = arith.constant 0.000000e+00 : f32
    %8 = vector.broadcast %cst_6 : f32 to vector<8x256xf32>
    %9 = arith.maximumf %7, %8 : vector<8x256xf32>
    %10 = arith.truncf %9 : vector<8x256xf32> to vector<8x256xbf16>
    %c0_7 = arith.constant 0 : index
    %c0_8 = arith.constant 0 : index
    %11 = vector.load %arg4[%c0_7, %c0_8] : memref<1024x128xbf16, #tpu.memory_space<vmem>>, vector<256x128xbf16>
    %cst_9 = arith.constant dense<0.000000e+00> : vector<8x128xf32>
    %12 = tpu.matmul %10, %11, %cst_9 {dimension_numbers = #tpu.dot_dimension_numbers<[1], [0], [0], [1], [0, 0, 1, 1], [], []>} : vector<8x256xbf16>, vector<256x128xbf16>, vector<8x128xf32> -> vector<8x128xf32>
    %13 = arith.addf %2, %12 : vector<8x128xf32>
    %c0_10 = arith.constant 0 : index
    %c256 = arith.constant 256 : index
    %14 = vector.load %arg2[%c0_10, %c256] : memref<32x1024xbf16, #tpu.memory_space<vmem>>, vector<32x256xbf16>
    %cst_11 = arith.constant dense<0.000000e+00> : vector<8x256xf32>
    %15 = tpu.matmul %1, %14, %cst_11 {dimension_numbers = #tpu.dot_dimension_numbers<[1], [0], [0], [1], [0, 0, 1, 1], [], []>} : vector<8x32xbf16>, vector<32x256xbf16>, vector<8x256xf32> -> vector<8x256xf32>
    %c0_12 = arith.constant 0 : index
    %c256_13 = arith.constant 256 : index
    %16 = vector.load %arg3[%c0_12, %c256_13] : memref<1x1024xf32, #tpu.memory_space<vmem>>, vector<1x256xf32>
    %17 = vector.broadcast %16 : vector<1x256xf32> to vector<8x256xf32>
    %18 = arith.addf %15, %17 : vector<8x256xf32>
    %cst_14 = arith.constant 0.000000e+00 : f32
    %19 = vector.broadcast %cst_14 : f32 to vector<8x256xf32>
    %20 = arith.maximumf %18, %19 : vector<8x256xf32>
    %21 = arith.truncf %20 : vector<8x256xf32> to vector<8x256xbf16>
    %c256_15 = arith.constant 256 : index
    %c0_16 = arith.constant 0 : index
    %22 = vector.load %arg4[%c256_15, %c0_16] : memref<1024x128xbf16, #tpu.memory_space<vmem>>, vector<256x128xbf16>
    %cst_17 = arith.constant dense<0.000000e+00> : vector<8x128xf32>
    %23 = tpu.matmul %21, %22, %cst_17 {dimension_numbers = #tpu.dot_dimension_numbers<[1], [0], [0], [1], [0, 0, 1, 1], [], []>} : vector<8x256xbf16>, vector<256x128xbf16>, vector<8x128xf32> -> vector<8x128xf32>
    %24 = arith.addf %13, %23 : vector<8x128xf32>
    %c0_18 = arith.constant 0 : index
    %c512 = arith.constant 512 : index
    %25 = vector.load %arg2[%c0_18, %c512] : memref<32x1024xbf16, #tpu.memory_space<vmem>>, vector<32x256xbf16>
    %cst_19 = arith.constant dense<0.000000e+00> : vector<8x256xf32>
    %26 = tpu.matmul %1, %25, %cst_19 {dimension_numbers = #tpu.dot_dimension_numbers<[1], [0], [0], [1], [0, 0, 1, 1], [], []>} : vector<8x32xbf16>, vector<32x256xbf16>, vector<8x256xf32> -> vector<8x256xf32>
    %c0_20 = arith.constant 0 : index
    %c512_21 = arith.constant 512 : index
    %27 = vector.load %arg3[%c0_20, %c512_21] : memref<1x1024xf32, #tpu.memory_space<vmem>>, vector<1x256xf32>
    %28 = vector.broadcast %27 : vector<1x256xf32> to vector<8x256xf32>
    %29 = arith.addf %26, %28 : vector<8x256xf32>
    %cst_22 = arith.constant 0.000000e+00 : f32
    %30 = vector.broadcast %cst_22 : f32 to vector<8x256xf32>
    %31 = arith.maximumf %29, %30 : vector<8x256xf32>
    %32 = arith.truncf %31 : vector<8x256xf32> to vector<8x256xbf16>
    %c512_23 = arith.constant 512 : index
    %c0_24 = arith.constant 0 : index
    %33 = vector.load %arg4[%c512_23, %c0_24] : memref<1024x128xbf16, #tpu.memory_space<vmem>>, vector<256x128xbf16>
    %cst_25 = arith.constant dense<0.000000e+00> : vector<8x128xf32>
    %34 = tpu.matmul %32, %33, %cst_25 {dimension_numbers = #tpu.dot_dimension_numbers<[1], [0], [0], [1], [0, 0, 1, 1], [], []>} : vector<8x256xbf16>, vector<256x128xbf16>, vector<8x128xf32> -> vector<8x128xf32>
    %35 = arith.addf %24, %34 : vector<8x128xf32>
    %c0_26 = arith.constant 0 : index
    %c768 = arith.constant 768 : index
    %36 = vector.load %arg2[%c0_26, %c768] : memref<32x1024xbf16, #tpu.memory_space<vmem>>, vector<32x256xbf16>
    %cst_27 = arith.constant dense<0.000000e+00> : vector<8x256xf32>
    %37 = tpu.matmul %1, %36, %cst_27 {dimension_numbers = #tpu.dot_dimension_numbers<[1], [0], [0], [1], [0, 0, 1, 1], [], []>} : vector<8x32xbf16>, vector<32x256xbf16>, vector<8x256xf32> -> vector<8x256xf32>
    %c0_28 = arith.constant 0 : index
    %c768_29 = arith.constant 768 : index
    %38 = vector.load %arg3[%c0_28, %c768_29] : memref<1x1024xf32, #tpu.memory_space<vmem>>, vector<1x256xf32>
    %39 = vector.broadcast %38 : vector<1x256xf32> to vector<8x256xf32>
    %40 = arith.addf %37, %39 : vector<8x256xf32>
    %cst_30 = arith.constant 0.000000e+00 : f32
    %41 = vector.broadcast %cst_30 : f32 to vector<8x256xf32>
    %42 = arith.maximumf %40, %41 : vector<8x256xf32>
    %43 = arith.truncf %42 : vector<8x256xf32> to vector<8x256xbf16>
    %c768_31 = arith.constant 768 : index
    %c0_32 = arith.constant 0 : index
    %44 = vector.load %arg4[%c768_31, %c0_32] : memref<1024x128xbf16, #tpu.memory_space<vmem>>, vector<256x128xbf16>
    %cst_33 = arith.constant dense<0.000000e+00> : vector<8x128xf32>
    %45 = tpu.matmul %43, %44, %cst_33 {dimension_numbers = #tpu.dot_dimension_numbers<[1], [0], [0], [1], [0, 0, 1, 1], [], []>} : vector<8x256xbf16>, vector<256x128xbf16>, vector<8x128xf32> -> vector<8x128xf32>
    %46 = arith.addf %35, %45 : vector<8x128xf32>
    %c0_34 = arith.constant 0 : index
    %c0_35 = arith.constant 0 : index
    %47 = vector.load %arg5[%c0_34, %c0_35] : memref<1x128xf32, #tpu.memory_space<vmem>>, vector<1x128xf32>
    %48 = vector.broadcast %47 : vector<1x128xf32> to vector<8x128xf32>
    %49 = arith.addf %46, %48 : vector<8x128xf32>
    %c0_36 = arith.constant 0 : index
    %c0_37 = arith.constant 0 : index
    %50 = vector.load %arg6[%c0_36, %c0_37] : memref<8x128xf32, #tpu.memory_space<vmem>>, vector<8x128xf32>
    tpu.vector_store %arg6[%c0_36, %c0_37], %49 {strides = array<i32>} : memref<8x128xf32, #tpu.memory_space<vmem>>, vector<8x128xf32>,
    return
  }
  func.func @transform_0(%arg0: i32) -> (i32, i32) {
    %c0_i32 = arith.constant 0 : i32
    %c0_i32_0 = arith.constant 0 : i32
    return %arg0, %c0_i32 : i32, i32
  }
  func.func @transform_1(%arg0: i32) -> (i32, i32) {
    %c0_i32 = arith.constant 0 : i32
    %c0_i32_0 = arith.constant 0 : i32
    %c0_i32_1 = arith.constant 0 : i32
    return %c0_i32, %c0_i32_0 : i32, i32
  }
  func.func @transform_2(%arg0: i32) -> (i32, i32) {
    %c0_i32 = arith.constant 0 : i32
    %c0_i32_0 = arith.constant 0 : i32
    %c0_i32_1 = arith.constant 0 : i32
    return %c0_i32, %c0_i32_0 : i32, i32
  }
  func.func @transform_3(%arg0: i32) -> (i32, i32) {
    %c0_i32 = arith.constant 0 : i32
    %c0_i32_0 = arith.constant 0 : i32
    %c0_i32_1 = arith.constant 0 : i32
    return %c0_i32, %c0_i32_0 : i32, i32
  }
  func.func @transform_4(%arg0: i32) -> (i32, i32) {
    %c0_i32 = arith.constant 0 : i32
    %c0_i32_0 = arith.constant 0 : i32
    %c0_i32_1 = arith.constant 0 : i32
    return %c0_i32, %c0_i32_0 : i32, i32
  }
  func.func @transform_5(%arg0: i32) -> (i32, i32) {
    %c0_i32 = arith.constant 0 : i32
    %c0_i32_0 = arith.constant 0 : i32
    return %arg0, %c0_i32 : i32, i32
  }
}

</mosaic_0001>

<llo_original>
// kernel: tpu_custom_call.1
$region0: #{tpu_custom_call.1}
  #allocation0 [shape = 'u32[]', space=smem, size = 0x4, offset = 0x4, fixed_abs, tag = 'smem constant byte address 0x4 - core index']
  #allocation1 [shape = 'u32[144,128]{1,0:T(1,128)}', space=vmem, size = 0x12000, scoped, tag = 'internal scratch']
  %s0 = inlined_call_operand.hbm [shape: f32[8,32], index: 0, kind: input, shape index: {}]
  %s1 = inlined_call_operand.hbm [shape: bf16[32,1024], index: 1, kind: input, shape index: {}]
  %s2 = inlined_call_operand.hbm [shape: f32[1,1024], index: 2, kind: input, shape index: {}]
  %s3 = inlined_call_operand.hbm [shape: bf16[1024,128], index: 3, kind: input, shape index: {}]
  %s4 = inlined_call_operand.vmem [shape: f32[1,128], index: 4, kind: input, shape index: {}]
  %s5 = inlined_call_operand.hbm [shape: f32[8,128], index: 5, kind: output, shape index: {}]
  %s6 = sld [smem:[#allocation0]]
  $region46: #{tpu_custom_call.1} parent=0
    _
  %s8 = ssub.s32 1, %s6
  %s9 = scalar_select 0, %s8, %s6
  $region1: #{tpu_custom_call.1} parent=0
    #allocation2 [shape = 'u8[4096]{0}', space=vmem, size = 0x1000, scoped, tag = 'input window, operand 0, single buffered']
    #allocation3 [shape = 's32[1]{0}', space=sflag, size = 0x4, scoped, tag = 'scoped memory for tpu_custom_call.1']
    #allocation4 [shape = 's32[1]{0}', space=sflag, size = 0x4, scoped, tag = 'scoped memory for tpu_custom_call.1']
    #allocation5 [shape = 'u8[65536]{0}', space=vmem, size = 0x10000, scoped, tag = 'input window, operand 1, single buffered']
    #allocation6 [shape = 's32[1]{0}', space=sflag, size = 0x4, scoped, tag = 'scoped memory for tpu_custom_call.1']
    #allocation7 [shape = 'u8[4096]{0}', space=vmem, size = 0x1000, scoped, tag = 'input window, operand 2, single buffered']
    #allocation8 [shape = 'u8[262144]{0}', space=vmem, size = 0x40000, scoped, tag = 'input window, operand 3, single buffered']
    #allocation9 [shape = 's32[1]{0}', space=sflag, size = 0x4, scoped, tag = 'scoped memory for tpu_custom_call.1']
    #allocation10 [shape = 'u8[4096]{0}', space=vmem, size = 0x1000, scoped, tag = 'output window, operand 0, single buffered']
    %10 = vsyncpa [#allocation3], 0
    %11 = vsyncpa [#allocation6], 0
    %12 = vsyncpa [#allocation9], 0
    %13 = vsyncpa [#allocation4], 0
    // Predicated region
    $region2: #{tpu_custom_call.1} parent=1 // pred_check
      _
    $region3: #{tpu_custom_call.1} parent=1 // pred_check_branch
      %15 = sbr.rel (0) target = $region5
    $region4: #{tpu_custom_call.1} parent=1 // pred_region
      %s17 = ssub.s32 128, 128
      %18 = vsyncadd [#allocation3], %s17
      %s20 = sshll.u32 [#allocation2], 4
      %s21 = int_to_ptr.vmem [resolvable:$true] %s20
      %23 = dma.hbm_to_vmem [thread:$0]  %s0, 128, %s21, [#allocation3]
    $region5: #{tpu_custom_call.1} parent=1 // pred_fallthru
      _
    // Predicated region
    $region6: #{tpu_custom_call.1} parent=1 // pred_check
      _
    $region7: #{tpu_custom_call.1} parent=1 // pred_check_branch
      %25 = sbr.rel (0) target = $region9
    $region8: #{tpu_custom_call.1} parent=1 // pred_region
      %s27 = ssub.s32 2048, 2048
      %28 = vsyncadd [#allocation6], %s27
      %s29 = sshll.u32 [#allocation5], 4
      %s30 = int_to_ptr.vmem [resolvable:$true] %s29
      %35 = dma.hbm_to_vmem [thread:$0]  %s1, 2048, %s30, [#allocation6], 512, 512, 32
    $region9: #{tpu_custom_call.1} parent=1 // pred_fallthru
      _
    // Predicated region
    $region10: #{tpu_custom_call.1} parent=1 // pred_check
      _
    $region11: #{tpu_custom_call.1} parent=1 // pred_check_branch
      %37 = sbr.rel (0) target = $region13
    $region12: #{tpu_custom_call.1} parent=1 // pred_region
      %s39 = ssub.s32 128, 128
      %40 = vsyncadd [#allocation6], %s39
      %s42 = sshll.u32 [#allocation7], 4
      %s43 = int_to_ptr.vmem [resolvable:$true] %s42
      %45 = dma.hbm_to_vmem [thread:$0]  %s2, 128, %s43, [#allocation6]
    $region13: #{tpu_custom_call.1} parent=1 // pred_fallthru
      _
    // Predicated region
    $region14: #{tpu_custom_call.1} parent=1 // pred_check
      _
    $region15: #{tpu_custom_call.1} parent=1 // pred_check_branch
      %47 = sbr.rel (0) target = $region17
    $region16: #{tpu_custom_call.1} parent=1 // pred_region
      %s49 = ssub.s32 8192, 8192
      %50 = vsyncadd [#allocation9], %s49
      %s51 = sshll.u32 [#allocation8], 4
      %s52 = int_to_ptr.vmem [resolvable:$true] %s51
      %57 = dma.hbm_to_vmem [thread:$0]  %s3, 8192, %s52, [#allocation9], 64, 64, 4
    $region17: #{tpu_custom_call.1} parent=1 // pred_fallthru
      _
    // Predicated region
    $region18: #{tpu_custom_call.1} parent=1 // pred_check
      _
    $region19: #{tpu_custom_call.1} parent=1 // pred_check_branch
      %59 = sbr.rel (0) target = $region21
    $region20: #{tpu_custom_call.1} parent=1 // pred_region
      _
    $region21: #{tpu_custom_call.1} parent=1 // pred_fallthru
      _
    // Predicated region
    $region22: #{tpu_custom_call.1} parent=1 // pred_check
      _
    $region23: #{tpu_custom_call.1} parent=1 // pred_check_branch
      %61 = sbr.rel (0) target = $region25
    $region24: #{tpu_custom_call.1} parent=1 // pred_region
      %62 = dma.done [#allocation3], 128
    $region25: #{tpu_custom_call.1} parent=1 // pred_fallthru
      _
    // Predicated region
    $region26: #{tpu_custom_call.1} parent=1 // pred_check
      _
    $region27: #{tpu_custom_call.1} parent=1 // pred_check_branch
      %64 = sbr.rel (0) target = $region29
    $region28: #{tpu_custom_call.1} parent=1 // pred_region
      %65 = dma.done [#allocation6], 2048
    $region29: #{tpu_custom_call.1} parent=1 // pred_fallthru
      _
    // Predicated region
    $region30: #{tpu_custom_call.1} parent=1 // pred_check
      _
    $region31: #{tpu_custom_call.1} parent=1 // pred_check_branch
      %67 = sbr.rel (0) target = $region33
    $region32: #{tpu_custom_call.1} parent=1 // pred_region
      %68 = dma.done [#allocation6], 128
    $region33: #{tpu_custom_call.1} parent=1 // pred_fallthru
      _
    // Predicated region
    $region34: #{tpu_custom_call.1} parent=1 // pred_check
      _
    $region35: #{tpu_custom_call.1} parent=1 // pred_check_branch
      %70 = sbr.rel (0) target = $region37
    $region36: #{tpu_custom_call.1} parent=1 // pred_region
      %71 = dma.done [#allocation9], 8192
    $region37: #{tpu_custom_call.1} parent=1 // pred_fallthru
      _
    %v73 = vld [vmem:[#allocation2] sm:$0xff]
    %v74 = vpack.c.bf16 %v73, %v73
    %v75 = vld [vmem:[#allocation5] sm:$0xff]
    %v76 = vld [vmem:[#allocation5 + $0x20] sm:$0xff]
    %v77 = vld [vmem:[#allocation5 + $0x40] sm:$0xff]
    %v78 = vld [vmem:[#allocation5 + $0x60] sm:$0xff]
    %v79 = vld [vmem:[#allocation7] sm:$0x3]
    %v81 = vlaneseq
    %v82 = vshrl.u32 %v81, 7
    %v83 = vsub.s32 0, %v82
    %v84 = vrot.slane %v79, %v83
    %v85 = vlaneseq
    %v86 = vshrl.u32 %v85, 7
    %v87 = vsub.s32 1, %v86
    %v88 = vrot.slane %v79, %v87
    %v95 = vunpack.c.l.b16 %v75
    %v96 = vunpack.c.h.b16 %v75
    %v97 = vunpack.c.l.b16 %v76
    %v98 = vunpack.c.h.b16 %v76
    %v99 = vunpack.c.l.b16 %v77
    %v100 = vunpack.c.h.b16 %v77
    %v101 = vunpack.c.l.b16 %v78
    %v102 = vunpack.c.h.b16 %v78
    %v103 = vpack.c.b16 %v97, %v95
    %v104 = vpack.c.b16 %v98, %v96
    %v105 = vpack.c.b16 %v101, %v99
    %v106 = vpack.c.b16 %v102, %v100
    %vm111 = vcmask 261120
    %v113 = vsel %vm111, %v74, 0
    %115 = vmatprep.subr.bf16.mxu0 %v104
    %116 = vmatpush1.bf16.msra.mxu0 %v103
    %117 = vmatprep.subr.bf16.mxu0 %v106
    %118 = vmatpush1.bf16.msra.mxu0 %v105
    %119 = vmatprep.subr.bf16.mxu0 0
    %120 = vmatpush1.bf16.msra.mxu0 0
    %121 = vmatprep.subr.bf16.mxu0 0
    %122 = vmatpush1.bf16.msra.mxu0 0
    %123 = vmatprep.subr.bf16.mxu0 0
    %124 = vmatpush1.bf16.msra.mxu0 0
    %125 = vmatprep.subr.bf16.mxu0 0
    %126 = vmatpush1.bf16.msra.mxu0 0
    %127 = vmatprep.subr.bf16.mxu0 0
    %128 = vmatpush1.bf16.msra.mxu0 0
    %129 = vmatprep.subr.bf16.mxu0 0
    %130 = vmatpush1.bf16.msra.mxu0 0
    %131 = vmatprep.subr.bf16.mxu0 0
    %132 = vmatpush1.bf16.msra.mxu0 0
    %133 = vmatprep.subr.bf16.mxu0 0
    %134 = vmatpush1.bf16.msra.mxu0 0
    %135 = vmatprep.subr.bf16.mxu0 0
    %136 = vmatpush1.bf16.msra.mxu0 0
    %137 = vmatprep.subr.bf16.mxu0 0
    %138 = vmatpush1.bf16.msra.mxu0 0
    %139 = vmatprep.subr.bf16.mxu0 0
    %140 = vmatpush1.bf16.msra.mxu0 0
    %141 = vmatprep.subr.bf16.mxu0 0
    %142 = vmatpush1.bf16.msra.mxu0 0
    %143 = vmatprep.subr.bf16.mxu0 0
    %144 = vmatpush1.bf16.msra.mxu0 0
    %145 = vmatprep.subr.bf16.mxu0 0
    %146 = vmatpush1.bf16.msra.mxu0 0
    %147 = vmatprep.mubr.bf16.mxu0 0
    %148 = vmatmul.mubr.bf16.gmra.mrb[0].mxu0 %v113
    %v149 = vpop.f32.mrb[0].mxu0
    %v150 = vadd.f32 %v84, %v149
    %v151 = vpop.f32.mrb[0].mxu0
    %v152 = vadd.f32 %v88, %v151
    %v153 = vpop.f32.mrb[0].mxu0
    %v154 = vpop.f32.mrb[0].mxu0
    %155 = vdwg.mxu0
    %v156 = vmax.f32 %v150, 0.0
    %v157 = vmax.f32 %v152, 0.0
    %v158 = vpack.c.bf16 %v156, %v156
    %v159 = vpack.c.bf16 %v157, %v157
    %v160 = vld [vmem:[#allocation8] sm:$0xf]
    %v161 = vld [vmem:[#allocation8 + $0x4] sm:$0xf]
    %v162 = vld [vmem:[#allocation8 + $0x8] sm:$0xf]
    %v163 = vld [vmem:[#allocation8 + $0xc] sm:$0xf]
    %v164 = vld [vmem:[#allocation8 + $0x10] sm:$0xf]
    %v165 = vld [vmem:[#allocation8 + $0x14] sm:$0xf]
    %v166 = vld [vmem:[#allocation8 + $0x18] sm:$0xf]
    %v167 = vld [vmem:[#allocation8 + $0x1c] sm:$0xf]
    %v168 = vld [vmem:[#allocation8 + $0x20] sm:$0xf]
    %v169 = vld [vmem:[#allocation8 + $0x24] sm:$0xf]
    %v170 = vld [vmem:[#allocation8 + $0x28] sm:$0xf]
    %v171 = vld [vmem:[#allocation8 + $0x2c] sm:$0xf]
    %v172 = vld [vmem:[#allocation8 + $0x30] sm:$0xf]
    %v173 = vld [vmem:[#allocation8 + $0x34] sm:$0xf]
    %v174 = vld [vmem:[#allocation8 + $0x38] sm:$0xf]
    %v175 = vld [vmem:[#allocation8 + $0x3c] sm:$0xf]
    %v176 = vld [vmem:[#allocation8 + $0x40] sm:$0xf]
    %v177 = vld [vmem:[#allocation8 + $0x44] sm:$0xf]
    %v178 = vld [vmem:[#allocation8 + $0x48] sm:$0xf]
    %v179 = vld [vmem:[#allocation8 + $0x4c] sm:$0xf]
    %v180 = vld [vmem:[#allocation8 + $0x50] sm:$0xf]
    %v181 = vld [vmem:[#allocation8 + $0x54] sm:$0xf]
    %v182 = vld [vmem:[#allocation8 + $0x58] sm:$0xf]
    %v183 = vld [vmem:[#allocation8 + $0x5c] sm:$0xf]
    %v184 = vld [vmem:[#allocation8 + $0x60] sm:$0xf]
    %v185 = vld [vmem:[#allocation8 + $0x64] sm:$0xf]
    %v186 = vld [vmem:[#allocation8 + $0x68] sm:$0xf]
    %v187 = vld [vmem:[#allocation8 + $0x6c] sm:$0xf]
    %v188 = vld [vmem:[#allocation8 + $0x70] sm:$0xf]
    %v189 = vld [vmem:[#allocation8 + $0x74] sm:$0xf]
    %v190 = vld [vmem:[#allocation8 + $0x78] sm:$0xf]
    %v191 = vld [vmem:[#allocation8 + $0x7c] sm:$0xf]
    %v192 = vld [vmem:[#allocation5 + $0x8] sm:$0xff]
    %v193 = vld [vmem:[#allocation5 + $0x28] sm:$0xff]
    %v194 = vld [vmem:[#allocation5 + $0x48] sm:$0xff]
    %v195 = vld [vmem:[#allocation5 + $0x68] sm:$0xff]
    %v196 = vld [vmem:[#allocation7 + $0x2] sm:$0x3]
    %v198 = vlaneseq
    %v199 = vshrl.u32 %v198, 7
    %v200 = vsub.s32 0, %v199
    %v201 = vrot.slane %v196, %v200
    %v202 = vlaneseq
    %v203 = vshrl.u32 %v202, 7
    %v204 = vsub.s32 1, %v203
    %v205 = vrot.slane %v196, %v204
    %v212 = vunpack.c.l.b16 %v192
    %v213 = vunpack.c.h.b16 %v192
    %v214 = vunpack.c.l.b16 %v193
    %v215 = vunpack.c.h.b16 %v193
    %v216 = vunpack.c.l.b16 %v194
    %v217 = vunpack.c.h.b16 %v194
    %v218 = vunpack.c.l.b16 %v195
    %v219 = vunpack.c.h.b16 %v195
    %v220 = vpack.c.b16 %v214, %v212
    %v221 = vpack.c.b16 %v215, %v213
    %v222 = vpack.c.b16 %v218, %v216
    %v223 = vpack.c.b16 %v219, %v217
    %228 = vmatprep.subr.bf16.mxu0 %v221
    %229 = vmatpush1.bf16.msra.mxu0 %v220
    %230 = vmatprep.subr.bf16.mxu0 %v223
    %231 = vmatpush1.bf16.msra.mxu0 %v222
    %232 = vmatprep.subr.bf16.mxu0 0
    %233 = vmatpush1.bf16.msra.mxu0 0
    %234 = vmatprep.subr.bf16.mxu0 0
    %235 = vmatpush1.bf16.msra.mxu0 0
    %236 = vmatprep.subr.bf16.mxu0 0
    %237 = vmatpush1.bf16.msra.mxu0 0
    %238 = vmatprep.subr.bf16.mxu0 0
    %239 = vmatpush1.bf16.msra.mxu0 0
    %240 = vmatprep.subr.bf16.mxu0 0
    %241 = vmatpush1.bf16.msra.mxu0 0
    %242 = vmatprep.subr.bf16.mxu0 0
    %243 = vmatpush1.bf16.msra.mxu0 0
    %244 = vmatprep.subr.bf16.mxu0 0
    %245 = vmatpush1.bf16.msra.mxu0 0
    %246 = vmatprep.subr.bf16.mxu0 0
    %247 = vmatpush1.bf16.msra.mxu0 0
    %248 = vmatprep.subr.bf16.mxu0 0
    %249 = vmatpush1.bf16.msra.mxu0 0
    %250 = vmatprep.subr.bf16.mxu0 0
    %251 = vmatpush1.bf16.msra.mxu0 0
    %252 = vmatprep.subr.bf16.mxu0 0
    %253 = vmatpush1.bf16.msra.mxu0 0
    %254 = vmatprep.subr.bf16.mxu0 0
    %255 = vmatpush1.bf16.msra.mxu0 0
    %256 = vmatprep.subr.bf16.mxu0 0
    %257 = vmatpush1.bf16.msra.mxu0 0
    %258 = vmatprep.subr.bf16.mxu0 0
    %259 = vmatpush1.bf16.msra.mxu0 0
    %260 = vmatprep.mubr.bf16.mxu0 0
    %261 = vmatmul.mubr.bf16.gmra.mrb[0].mxu0 %v113
    %v262 = vpop.f32.mrb[0].mxu0
    %v263 = vadd.f32 %v201, %v262
    %v264 = vpop.f32.mrb[0].mxu0
    %v265 = vadd.f32 %v205, %v264
    %v266 = vpop.f32.mrb[0].mxu0
    %v267 = vpop.f32.mrb[0].mxu0
    %268 = vdwg.mxu0
    %v269 = vmax.f32 %v263, 0.0
    %v270 = vmax.f32 %v265, 0.0
    %v271 = vpack.c.bf16 %v269, %v269
    %v272 = vpack.c.bf16 %v270, %v270
    %v273 = vld [vmem:[#allocation8 + $0x80] sm:$0xf]
    %v274 = vld [vmem:[#allocation8 + $0x84] sm:$0xf]
    %v275 = vld [vmem:[#allocation8 + $0x88] sm:$0xf]
    %v276 = vld [vmem:[#allocation8 + $0x8c] sm:$0xf]
    %v277 = vld [vmem:[#allocation8 + $0x90] sm:$0xf]
    %v278 = vld [vmem:[#allocation8 + $0x94] sm:$0xf]
    %v279 = vld [vmem:[#allocation8 + $0x98] sm:$0xf]
    %v280 = vld [vmem:[#allocation8 + $0x9c] sm:$0xf]
    %v281 = vld [vmem:[#allocation8 + $0xa0] sm:$0xf]
    %v282 = vld [vmem:[#allocation8 + $0xa4] sm:$0xf]
    %v283 = vld [vmem:[#allocation8 + $0xa8] sm:$0xf]
    %v284 = vld [vmem:[#allocation8 + $0xac] sm:$0xf]
    %v285 = vld [vmem:[#allocation8 + $0xb0] sm:$0xf]
    %v286 = vld [vmem:[#allocation8 + $0xb4] sm:$0xf]
    %v287 = vld [vmem:[#allocation8 + $0xb8] sm:$0xf]
    %v288 = vld [vmem:[#allocation8 + $0xbc] sm:$0xf]
    %v289 = vld [vmem:[#allocation8 + $0xc0] sm:$0xf]
    %v290 = vld [vmem:[#allocation8 + $0xc4] sm:$0xf]
    %v291 = vld [vmem:[#allocation8 + $0xc8] sm:$0xf]
    %v292 = vld [vmem:[#allocation8 + $0xcc] sm:$0xf]
    %v293 = vld [vmem:[#allocation8 + $0xd0] sm:$0xf]
    %v294 = vld [vmem:[#allocation8 + $0xd4] sm:$0xf]
    %v295 = vld [vmem:[#allocation8 + $0xd8] sm:$0xf]
    %v296 = vld [vmem:[#allocation8 + $0xdc] sm:$0xf]
    %v297 = vld [vmem:[#allocation8 + $0xe0] sm:$0xf]
    %v298 = vld [vmem:[#allocation8 + $0xe4] sm:$0xf]
    %v299 = vld [vmem:[#allocation8 + $0xe8] sm:$0xf]
    %v300 = vld [vmem:[#allocation8 + $0xec] sm:$0xf]
    %v301 = vld [vmem:[#allocation8 + $0xf0] sm:$0xf]
    %v302 = vld [vmem:[#allocation8 + $0xf4] sm:$0xf]
    %v303 = vld [vmem:[#allocation8 + $0xf8] sm:$0xf]
    %v304 = vld [vmem:[#allocation8 + $0xfc] sm:$0xf]
    %v337 = vunpack.c.l.b16 %v273
    %v338 = vunpack.c.l.b16 %v274
    %v339 = vunpack.c.l.b16 %v275
    %v340 = vunpack.c.l.b16 %v276
    %v341 = vunpack.c.l.b16 %v277
    %v342 = vunpack.c.l.b16 %v278
    %v343 = vunpack.c.l.b16 %v279
    %v344 = vunpack.c.l.b16 %v280
    %v345 = vunpack.c.l.b16 %v281
    %v346 = vunpack.c.l.b16 %v282
    %v347 = vunpack.c.l.b16 %v283
    %v348 = vunpack.c.l.b16 %v284
    %v349 = vunpack.c.l.b16 %v285
    %v350 = vunpack.c.l.b16 %v286
    %v351 = vunpack.c.l.b16 %v287
    %v352 = vunpack.c.l.b16 %v288
    %v353 = vunpack.c.l.b16 %v289
    %v354 = vunpack.c.l.b16 %v290
    %v355 = vunpack.c.l.b16 %v291
    %v356 = vunpack.c.l.b16 %v292
    %v357 = vunpack.c.l.b16 %v293
    %v358 = vunpack.c.l.b16 %v294
    %v359 = vunpack.c.l.b16 %v295
    %v360 = vunpack.c.l.b16 %v296
    %v361 = vunpack.c.l.b16 %v297
    %v362 = vunpack.c.l.b16 %v298
    %v363 = vunpack.c.l.b16 %v299
    %v364 = vunpack.c.l.b16 %v300
    %v365 = vunpack.c.l.b16 %v301
    %v366 = vunpack.c.l.b16 %v302
    %v367 = vunpack.c.l.b16 %v303
    %v368 = vunpack.c.l.b16 %v304
    %v369 = vpack.c.b16 %v338, %v337
    %v370 = vpack.c.b16 %v340, %v339
    %v371 = vpack.c.b16 %v342, %v341
    %v372 = vpack.c.b16 %v344, %v343
    %v373 = vpack.c.b16 %v346, %v345
    %v374 = vpack.c.b16 %v348, %v347
    %v375 = vpack.c.b16 %v350, %v349
    %v376 = vpack.c.b16 %v352, %v351
    %v377 = vpack.c.b16 %v354, %v353
    %v378 = vpack.c.b16 %v356, %v355
    %v379 = vpack.c.b16 %v358, %v357
    %v380 = vpack.c.b16 %v360, %v359
    %v381 = vpack.c.b16 %v362, %v361
    %v382 = vpack.c.b16 %v364, %v363
    %v383 = vpack.c.b16 %v366, %v365
    %v384 = vpack.c.b16 %v368, %v367
    %401 = vmatprep.subr.bf16.mxu0 0
    %402 = vmatpush1.bf16.msra.mxu0 %v369
    %403 = vmatprep.subr.bf16.mxu0 0
    %404 = vmatpush1.bf16.msra.mxu0 %v370
    %405 = vmatprep.subr.bf16.mxu0 0
    %406 = vmatpush1.bf16.msra.mxu0 %v371
    %407 = vmatprep.subr.bf16.mxu0 0
    %408 = vmatpush1.bf16.msra.mxu0 %v372
    %409 = vmatprep.subr.bf16.mxu0 0
    %410 = vmatpush1.bf16.msra.mxu0 %v373
    %411 = vmatprep.subr.bf16.mxu0 0
    %412 = vmatpush1.bf16.msra.mxu0 %v374
    %413 = vmatprep.subr.bf16.mxu0 0
    %414 = vmatpush1.bf16.msra.mxu0 %v375
    %415 = vmatprep.subr.bf16.mxu0 0
    %416 = vmatpush1.bf16.msra.mxu0 %v376
    %417 = vmatprep.subr.bf16.mxu0 0
    %418 = vmatpush1.bf16.msra.mxu0 %v377
    %419 = vmatprep.subr.bf16.mxu0 0
    %420 = vmatpush1.bf16.msra.mxu0 %v378
    %421 = vmatprep.subr.bf16.mxu0 0
    %422 = vmatpush1.bf16.msra.mxu0 %v379
    %423 = vmatprep.subr.bf16.mxu0 0
    %424 = vmatpush1.bf16.msra.mxu0 %v380
    %425 = vmatprep.subr.bf16.mxu0 0
    %426 = vmatpush1.bf16.msra.mxu0 %v381
    %427 = vmatprep.subr.bf16.mxu0 0
    %428 = vmatpush1.bf16.msra.mxu0 %v382
    %429 = vmatprep.subr.bf16.mxu0 0
    %430 = vmatpush1.bf16.msra.mxu0 %v383
    %431 = vmatprep.subr.bf16.mxu0 0
    %432 = vmatpush1.bf16.msra.mxu0 %v384
    %433 = vmatprep.mubr.bf16.mxu0 %v272
    %434 = vmatmul.mubr.bf16.gmra.mrb[0].mxu0 %v271
    %v435 = vpop.f32.mrb[0].mxu0
    %v436 = vadd.f32 0.0, %v435
    %v437 = vpop.f32.mrb[0].mxu0
    %v438 = vpop.f32.mrb[0].mxu0
    %v439 = vpop.f32.mrb[0].mxu0
    %440 = vdwg.mxu0
    %v473 = vunpack.c.l.b16 %v160
    %v474 = vunpack.c.l.b16 %v161
    %v475 = vunpack.c.l.b16 %v162
    %v476 = vunpack.c.l.b16 %v163
    %v477 = vunpack.c.l.b16 %v164
    %v478 = vunpack.c.l.b16 %v165
    %v479 = vunpack.c.l.b16 %v166
    %v480 = vunpack.c.l.b16 %v167
    %v481 = vunpack.c.l.b16 %v168
    %v482 = vunpack.c.l.b16 %v169
    %v483 = vunpack.c.l.b16 %v170
    %v484 = vunpack.c.l.b16 %v171
    %v485 = vunpack.c.l.b16 %v172
    %v486 = vunpack.c.l.b16 %v173
    %v487 = vunpack.c.l.b16 %v174
    %v488 = vunpack.c.l.b16 %v175
    %v489 = vunpack.c.l.b16 %v176
    %v490 = vunpack.c.l.b16 %v177
    %v491 = vunpack.c.l.b16 %v178
    %v492 = vunpack.c.l.b16 %v179
    %v493 = vunpack.c.l.b16 %v180
    %v494 = vunpack.c.l.b16 %v181
    %v495 = vunpack.c.l.b16 %v182
    %v496 = vunpack.c.l.b16 %v183
    %v497 = vunpack.c.l.b16 %v184
    %v498 = vunpack.c.l.b16 %v185
    %v499 = vunpack.c.l.b16 %v186
    %v500 = vunpack.c.l.b16 %v187
    %v501 = vunpack.c.l.b16 %v188
    %v502 = vunpack.c.l.b16 %v189
    %v503 = vunpack.c.l.b16 %v190
    %v504 = vunpack.c.l.b16 %v191
    %v505 = vpack.c.b16 %v474, %v473
    %v506 = vpack.c.b16 %v476, %v475
    %v507 = vpack.c.b16 %v478, %v477
    %v508 = vpack.c.b16 %v480, %v479
    %v509 = vpack.c.b16 %v482, %v481
    %v510 = vpack.c.b16 %v484, %v483
    %v511 = vpack.c.b16 %v486, %v485
    %v512 = vpack.c.b16 %v488, %v487
    %v513 = vpack.c.b16 %v490, %v489
    %v514 = vpack.c.b16 %v492, %v491
    %v515 = vpack.c.b16 %v494, %v493
    %v516 = vpack.c.b16 %v496, %v495
    %v517 = vpack.c.b16 %v498, %v497
    %v518 = vpack.c.b16 %v500, %v499
    %v519 = vpack.c.b16 %v502, %v501
    %v520 = vpack.c.b16 %v504, %v503
    %537 = vmatprep.subr.bf16.mxu0 0
    %538 = vmatpush1.bf16.msra.mxu0 %v505
    %539 = vmatprep.subr.bf16.mxu0 0
    %540 = vmatpush1.bf16.msra.mxu0 %v506
    %541 = vmatprep.subr.bf16.mxu0 0
    %542 = vmatpush1.bf16.msra.mxu0 %v507
    %543 = vmatprep.subr.bf16.mxu0 0
    %544 = vmatpush1.bf16.msra.mxu0 %v508
    %545 = vmatprep.subr.bf16.mxu0 0
    %546 = vmatpush1.bf16.msra.mxu0 %v509
    %547 = vmatprep.subr.bf16.mxu0 0
    %548 = vmatpush1.bf16.msra.mxu0 %v510
    %549 = vmatprep.subr.bf16.mxu0 0
    %550 = vmatpush1.bf16.msra.mxu0 %v511
    %551 = vmatprep.subr.bf16.mxu0 0
    %552 = vmatpush1.bf16.msra.mxu0 %v512
    %553 = vmatprep.subr.bf16.mxu0 0
    %554 = vmatpush1.bf16.msra.mxu0 %v513
    %555 = vmatprep.subr.bf16.mxu0 0
    %556 = vmatpush1.bf16.msra.mxu0 %v514
    %557 = vmatprep.subr.bf16.mxu0 0
    %558 = vmatpush1.bf16.msra.mxu0 %v515
    %559 = vmatprep.subr.bf16.mxu0 0
    %560 = vmatpush1.bf16.msra.mxu0 %v516
    %561 = vmatprep.subr.bf16.mxu0 0
    %562 = vmatpush1.bf16.msra.mxu0 %v517
    %563 = vmatprep.subr.bf16.mxu0 0
    %564 = vmatpush1.bf16.msra.mxu0 %v518
    %565 = vmatprep.subr.bf16.mxu0 0
    %566 = vmatpush1.bf16.msra.mxu0 %v519
    %567 = vmatprep.subr.bf16.mxu0 0
    %568 = vmatpush1.bf16.msra.mxu0 %v520
    %569 = vmatprep.mubr.bf16.mxu0 %v159
    %570 = vmatmul.mubr.bf16.gmra.mrb[0].mxu0 %v158
    %v571 = vpop.f32.mrb[0].mxu0
    %v572 = vadd.f32 %v436, %v571
    %v573 = vpop.f32.mrb[0].mxu0
    %v574 = vpop.f32.mrb[0].mxu0
    %v575 = vpop.f32.mrb[0].mxu0
    %576 = vdwg.mxu0
    %v577 = vld [vmem:[#allocation5 + $0x10] sm:$0xff]
    %v578 = vld [vmem:[#allocation5 + $0x30] sm:$0xff]
    %v579 = vld [vmem:[#allocation5 + $0x50] sm:$0xff]
    %v580 = vld [vmem:[#allocation5 + $0x70] sm:$0xff]
    %v581 = vld [vmem:[#allocation7 + $0x4] sm:$0x3]
    %v583 = vlaneseq
    %v584 = vshrl.u32 %v583, 7
    %v585 = vsub.s32 0, %v584
    %v586 = vrot.slane %v581, %v585
    %v587 = vlaneseq
    %v588 = vshrl.u32 %v587, 7
    %v589 = vsub.s32 1, %v588
    %v590 = vrot.slane %v581, %v589
    %v597 = vunpack.c.l.b16 %v577
    %v598 = vunpack.c.h.b16 %v577
    %v599 = vunpack.c.l.b16 %v578
    %v600 = vunpack.c.h.b16 %v578
    %v601 = vunpack.c.l.b16 %v579
    %v602 = vunpack.c.h.b16 %v579
    %v603 = vunpack.c.l.b16 %v580
    %v604 = vunpack.c.h.b16 %v580
    %v605 = vpack.c.b16 %v599, %v597
    %v606 = vpack.c.b16 %v600, %v598
    %v607 = vpack.c.b16 %v603, %v601
    %v608 = vpack.c.b16 %v604, %v602
    %613 = vmatprep.subr.bf16.mxu0 %v606
    %614 = vmatpush1.bf16.msra.mxu0 %v605
    %615 = vmatprep.subr.bf16.mxu0 %v608
    %616 = vmatpush1.bf16.msra.mxu0 %v607
    %617 = vmatprep.subr.bf16.mxu0 0
    %618 = vmatpush1.bf16.msra.mxu0 0
    %619 = vmatprep.subr.bf16.mxu0 0
    %620 = vmatpush1.bf16.msra.mxu0 0
    %621 = vmatprep.subr.bf16.mxu0 0
    %622 = vmatpush1.bf16.msra.mxu0 0
    %623 = vmatprep.subr.bf16.mxu0 0
    %624 = vmatpush1.bf16.msra.mxu0 0
    %625 = vmatprep.subr.bf16.mxu0 0
    %626 = vmatpush1.bf16.msra.mxu0 0
    %627 = vmatprep.subr.bf16.mxu0 0
    %628 = vmatpush1.bf16.msra.mxu0 0
    %629 = vmatprep.subr.bf16.mxu0 0
    %630 = vmatpush1.bf16.msra.mxu0 0
    %631 = vmatprep.subr.bf16.mxu0 0
    %632 = vmatpush1.bf16.msra.mxu0 0
    %633 = vmatprep.subr.bf16.mxu0 0
    %634 = vmatpush1.bf16.msra.mxu0 0
    %635 = vmatprep.subr.bf16.mxu0 0
    %636 = vmatpush1.bf16.msra.mxu0 0
    %637 = vmatprep.subr.bf16.mxu0 0
    %638 = vmatpush1.bf16.msra.mxu0 0
    %639 = vmatprep.subr.bf16.mxu0 0
    %640 = vmatpush1.bf16.msra.mxu0 0
    %641 = vmatprep.subr.bf16.mxu0 0
    %642 = vmatpush1.bf16.msra.mxu0 0
    %643 = vmatprep.subr.bf16.mxu0 0
    %644 = vmatpush1.bf16.msra.mxu0 0
    %645 = vmatprep.mubr.bf16.mxu0 0
    %646 = vmatmul.mubr.bf16.gmra.mrb[0].mxu0 %v113
    %v647 = vpop.f32.mrb[0].mxu0
    %v648 = vadd.f32 %v586, %v647
    %v649 = vpop.f32.mrb[0].mxu0
    %v650 = vadd.f32 %v590, %v649
    %v651 = vpop.f32.mrb[0].mxu0
    %v652 = vpop.f32.mrb[0].mxu0
    %653 = vdwg.mxu0
    %v654 = vmax.f32 %v648, 0.0
    %v655 = vmax.f32 %v650, 0.0
    %v656 = vpack.c.bf16 %v654, %v654
    %v657 = vpack.c.bf16 %v655, %v655
    %v658 = vld [vmem:[#allocation8 + $0x100] sm:$0xf]
    %v659 = vld [vmem:[#allocation8 + $0x104] sm:$0xf]
    %v660 = vld [vmem:[#allocation8 + $0x108] sm:$0xf]
    %v661 = vld [vmem:[#allocation8 + $0x10c] sm:$0xf]
    %v662 = vld [vmem:[#allocation8 + $0x110] sm:$0xf]
    %v663 = vld [vmem:[#allocation8 + $0x114] sm:$0xf]
    %v664 = vld [vmem:[#allocation8 + $0x118] sm:$0xf]
    %v665 = vld [vmem:[#allocation8 + $0x11c] sm:$0xf]
    %v666 = vld [vmem:[#allocation8 + $0x120] sm:$0xf]
    %v667 = vld [vmem:[#allocation8 + $0x124] sm:$0xf]
    %v668 = vld [vmem:[#allocation8 + $0x128] sm:$0xf]
    %v669 = vld [vmem:[#allocation8 + $0x12c] sm:$0xf]
    %v670 = vld [vmem:[#allocation8 + $0x130] sm:$0xf]
    %v671 = vld [vmem:[#allocation8 + $0x134] sm:$0xf]
    %v672 = vld [vmem:[#allocation8 + $0x138] sm:$0xf]
    %v673 = vld [vmem:[#allocation8 + $0x13c] sm:$0xf]
    %v674 = vld [vmem:[#allocation8 + $0x140] sm:$0xf]
    %v675 = vld [vmem:[#allocation8 + $0x144] sm:$0xf]
    %v676 = vld [vmem:[#allocation8 + $0x148] sm:$0xf]
    %v677 = vld [vmem:[#allocation8 + $0x14c] sm:$0xf]
    %v678 = vld [vmem:[#allocation8 + $0x150] sm:$0xf]
    %v679 = vld [vmem:[#allocation8 + $0x154] sm:$0xf]
    %v680 = vld [vmem:[#allocation8 + $0x158] sm:$0xf]
    %v681 = vld [vmem:[#allocation8 + $0x15c] sm:$0xf]
    %v682 = vld [vmem:[#allocation8 + $0x160] sm:$0xf]
    %v683 = vld [vmem:[#allocation8 + $0x164] sm:$0xf]
    %v684 = vld [vmem:[#allocation8 + $0x168] sm:$0xf]
    %v685 = vld [vmem:[#allocation8 + $0x16c] sm:$0xf]
    %v686 = vld [vmem:[#allocation8 + $0x170] sm:$0xf]
    %v687 = vld [vmem:[#allocation8 + $0x174] sm:$0xf]
    %v688 = vld [vmem:[#allocation8 + $0x178] sm:$0xf]
    %v689 = vld [vmem:[#allocation8 + $0x17c] sm:$0xf]
    %v722 = vunpack.c.l.b16 %v658
    %v723 = vunpack.c.l.b16 %v659
    %v724 = vunpack.c.l.b16 %v660
    %v725 = vunpack.c.l.b16 %v661
    %v726 = vunpack.c.l.b16 %v662
    %v727 = vunpack.c.l.b16 %v663
    %v728 = vunpack.c.l.b16 %v664
    %v729 = vunpack.c.l.b16 %v665
    %v730 = vunpack.c.l.b16 %v666
    %v731 = vunpack.c.l.b16 %v667
    %v732 = vunpack.c.l.b16 %v668
    %v733 = vunpack.c.l.b16 %v669
    %v734 = vunpack.c.l.b16 %v670
    %v735 = vunpack.c.l.b16 %v671
    %v736 = vunpack.c.l.b16 %v672
    %v737 = vunpack.c.l.b16 %v673
    %v738 = vunpack.c.l.b16 %v674
    %v739 = vunpack.c.l.b16 %v675
    %v740 = vunpack.c.l.b16 %v676
    %v741 = vunpack.c.l.b16 %v677
    %v742 = vunpack.c.l.b16 %v678
    %v743 = vunpack.c.l.b16 %v679
    %v744 = vunpack.c.l.b16 %v680
    %v745 = vunpack.c.l.b16 %v681
    %v746 = vunpack.c.l.b16 %v682
    %v747 = vunpack.c.l.b16 %v683
    %v748 = vunpack.c.l.b16 %v684
    %v749 = vunpack.c.l.b16 %v685
    %v750 = vunpack.c.l.b16 %v686
    %v751 = vunpack.c.l.b16 %v687
    %v752 = vunpack.c.l.b16 %v688
    %v753 = vunpack.c.l.b16 %v689
    %v754 = vpack.c.b16 %v723, %v722
    %v755 = vpack.c.b16 %v725, %v724
    %v756 = vpack.c.b16 %v727, %v726
    %v757 = vpack.c.b16 %v729, %v728
    %v758 = vpack.c.b16 %v731, %v730
    %v759 = vpack.c.b16 %v733, %v732
    %v760 = vpack.c.b16 %v735, %v734
    %v761 = vpack.c.b16 %v737, %v736
    %v762 = vpack.c.b16 %v739, %v738
    %v763 = vpack.c.b16 %v741, %v740
    %v764 = vpack.c.b16 %v743, %v742
    %v765 = vpack.c.b16 %v745, %v744
    %v766 = vpack.c.b16 %v747, %v746
    %v767 = vpack.c.b16 %v749, %v748
    %v768 = vpack.c.b16 %v751, %v750
    %v769 = vpack.c.b16 %v753, %v752
    %786 = vmatprep.subr.bf16.mxu0 0
    %787 = vmatpush1.bf16.msra.mxu0 %v754
    %788 = vmatprep.subr.bf16.mxu0 0
    %789 = vmatpush1.bf16.msra.mxu0 %v755
    %790 = vmatprep.subr.bf16.mxu0 0
    %791 = vmatpush1.bf16.msra.mxu0 %v756
    %792 = vmatprep.subr.bf16.mxu0 0
    %793 = vmatpush1.bf16.msra.mxu0 %v757
    %794 = vmatprep.subr.bf16.mxu0 0
    %795 = vmatpush1.bf16.msra.mxu0 %v758
    %796 = vmatprep.subr.bf16.mxu0 0
    %797 = vmatpush1.bf16.msra.mxu0 %v759
    %798 = vmatprep.subr.bf16.mxu0 0
    %799 = vmatpush1.bf16.msra.mxu0 %v760
    %800 = vmatprep.subr.bf16.mxu0 0
    %801 = vmatpush1.bf16.msra.mxu0 %v761
    %802 = vmatprep.subr.bf16.mxu0 0
    %803 = vmatpush1.bf16.msra.mxu0 %v762
    %804 = vmatprep.subr.bf16.mxu0 0
    %805 = vmatpush1.bf16.msra.mxu0 %v763
    %806 = vmatprep.subr.bf16.mxu0 0
    %807 = vmatpush1.bf16.msra.mxu0 %v764
    %808 = vmatprep.subr.bf16.mxu0 0
    %809 = vmatpush1.bf16.msra.mxu0 %v765
    %810 = vmatprep.subr.bf16.mxu0 0
    %811 = vmatpush1.bf16.msra.mxu0 %v766
    %812 = vmatprep.subr.bf16.mxu0 0
    %813 = vmatpush1.bf16.msra.mxu0 %v767
    %814 = vmatprep.subr.bf16.mxu0 0
    %815 = vmatpush1.bf16.msra.mxu0 %v768
    %816 = vmatprep.subr.bf16.mxu0 0
    %817 = vmatpush1.bf16.msra.mxu0 %v769
    %818 = vmatprep.mubr.bf16.mxu0 %v657
    %819 = vmatmul.mubr.bf16.gmra.mrb[0].mxu0 %v656
    %v820 = vpop.f32.mrb[0].mxu0
    %v821 = vadd.f32 0.0, %v820
    %v822 = vpop.f32.mrb[0].mxu0
    %v823 = vpop.f32.mrb[0].mxu0
    %v824 = vpop.f32.mrb[0].mxu0
    %825 = vdwg.mxu0
    %v826 = vadd.f32 %v572, %v821
    %v827 = vld [vmem:[#allocation5 + $0x18] sm:$0xff]
    %v828 = vld [vmem:[#allocation5 + $0x38] sm:$0xff]
    %v829 = vld [vmem:[#allocation5 + $0x58] sm:$0xff]
    %v830 = vld [vmem:[#allocation5 + $0x78] sm:$0xff]
    %v831 = vld [vmem:[#allocation7 + $0x6] sm:$0x3]
    %v833 = vlaneseq
    %v834 = vshrl.u32 %v833, 7
    %v835 = vsub.s32 0, %v834
    %v836 = vrot.slane %v831, %v835
    %v837 = vlaneseq
    %v838 = vshrl.u32 %v837, 7
    %v839 = vsub.s32 1, %v838
    %v840 = vrot.slane %v831, %v839
    %v847 = vunpack.c.l.b16 %v827
    %v848 = vunpack.c.h.b16 %v827
    %v849 = vunpack.c.l.b16 %v828
    %v850 = vunpack.c.h.b16 %v828
    %v851 = vunpack.c.l.b16 %v829
    %v852 = vunpack.c.h.b16 %v829
    %v853 = vunpack.c.l.b16 %v830
    %v854 = vunpack.c.h.b16 %v830
    %v855 = vpack.c.b16 %v849, %v847
    %v856 = vpack.c.b16 %v850, %v848
    %v857 = vpack.c.b16 %v853, %v851
    %v858 = vpack.c.b16 %v854, %v852
    %863 = vmatprep.subr.bf16.mxu0 %v856
    %864 = vmatpush1.bf16.msra.mxu0 %v855
    %865 = vmatprep.subr.bf16.mxu0 %v858
    %866 = vmatpush1.bf16.msra.mxu0 %v857
    %867 = vmatprep.subr.bf16.mxu0 0
    %868 = vmatpush1.bf16.msra.mxu0 0
    %869 = vmatprep.subr.bf16.mxu0 0
    %870 = vmatpush1.bf16.msra.mxu0 0
    %871 = vmatprep.subr.bf16.mxu0 0
    %872 = vmatpush1.bf16.msra.mxu0 0
    %873 = vmatprep.subr.bf16.mxu0 0
    %874 = vmatpush1.bf16.msra.mxu0 0
    %875 = vmatprep.subr.bf16.mxu0 0
    %876 = vmatpush1.bf16.msra.mxu0 0
    %877 = vmatprep.subr.bf16.mxu0 0
    %878 = vmatpush1.bf16.msra.mxu0 0
    %879 = vmatprep.subr.bf16.mxu0 0
    %880 = vmatpush1.bf16.msra.mxu0 0
    %881 = vmatprep.subr.bf16.mxu0 0
    %882 = vmatpush1.bf16.msra.mxu0 0
    %883 = vmatprep.subr.bf16.mxu0 0
    %884 = vmatpush1.bf16.msra.mxu0 0
    %885 = vmatprep.subr.bf16.mxu0 0
    %886 = vmatpush1.bf16.msra.mxu0 0
    %887 = vmatprep.subr.bf16.mxu0 0
    %888 = vmatpush1.bf16.msra.mxu0 0
    %889 = vmatprep.subr.bf16.mxu0 0
    %890 = vmatpush1.bf16.msra.mxu0 0
    %891 = vmatprep.subr.bf16.mxu0 0
    %892 = vmatpush1.bf16.msra.mxu0 0
    %893 = vmatprep.subr.bf16.mxu0 0
    %894 = vmatpush1.bf16.msra.mxu0 0
    %895 = vmatprep.mubr.bf16.mxu0 0
    %896 = vmatmul.mubr.bf16.gmra.mrb[0].mxu0 %v113
    %v897 = vpop.f32.mrb[0].mxu0
    %v898 = vadd.f32 %v836, %v897
    %v899 = vpop.f32.mrb[0].mxu0
    %v900 = vadd.f32 %v840, %v899
    %v901 = vpop.f32.mrb[0].mxu0
    %v902 = vpop.f32.mrb[0].mxu0
    %903 = vdwg.mxu0
    %v904 = vmax.f32 %v898, 0.0
    %v905 = vmax.f32 %v900, 0.0
    %v906 = vpack.c.bf16 %v904, %v904
    %v907 = vpack.c.bf16 %v905, %v905
    %v908 = vld [vmem:[#allocation8 + $0x180] sm:$0xf]
    %v909 = vld [vmem:[#allocation8 + $0x184] sm:$0xf]
    %v910 = vld [vmem:[#allocation8 + $0x188] sm:$0xf]
    %v911 = vld [vmem:[#allocation8 + $0x18c] sm:$0xf]
    %v912 = vld [vmem:[#allocation8 + $0x190] sm:$0xf]
    %v913 = vld [vmem:[#allocation8 + $0x194] sm:$0xf]
    %v914 = vld [vmem:[#allocation8 + $0x198] sm:$0xf]
    %v915 = vld [vmem:[#allocation8 + $0x19c] sm:$0xf]
    %v916 = vld [vmem:[#allocation8 + $0x1a0] sm:$0xf]
    %v917 = vld [vmem:[#allocation8 + $0x1a4] sm:$0xf]
    %v918 = vld [vmem:[#allocation8 + $0x1a8] sm:$0xf]
    %v919 = vld [vmem:[#allocation8 + $0x1ac] sm:$0xf]
    %v920 = vld [vmem:[#allocation8 + $0x1b0] sm:$0xf]
    %v921 = vld [vmem:[#allocation8 + $0x1b4] sm:$0xf]
    %v922 = vld [vmem:[#allocation8 + $0x1b8] sm:$0xf]
    %v923 = vld [vmem:[#allocation8 + $0x1bc] sm:$0xf]
    %v924 = vld [vmem:[#allocation8 + $0x1c0] sm:$0xf]
    %v925 = vld [vmem:[#allocation8 + $0x1c4] sm:$0xf]
    %v926 = vld [vmem:[#allocation8 + $0x1c8] sm:$0xf]
    %v927 = vld [vmem:[#allocation8 + $0x1cc] sm:$0xf]
    %v928 = vld [vmem:[#allocation8 + $0x1d0] sm:$0xf]
    %v929 = vld [vmem:[#allocation8 + $0x1d4] sm:$0xf]
    %v930 = vld [vmem:[#allocation8 + $0x1d8] sm:$0xf]
    %v931 = vld [vmem:[#allocation8 + $0x1dc] sm:$0xf]
    %v932 = vld [vmem:[#allocation8 + $0x1e0] sm:$0xf]
    %v933 = vld [vmem:[#allocation8 + $0x1e4] sm:$0xf]
    %v934 = vld [vmem:[#allocation8 + $0x1e8] sm:$0xf]
    %v935 = vld [vmem:[#allocation8 + $0x1ec] sm:$0xf]
    %v936 = vld [vmem:[#allocation8 + $0x1f0] sm:$0xf]
    %v937 = vld [vmem:[#allocation8 + $0x1f4] sm:$0xf]
    %v938 = vld [vmem:[#allocation8 + $0x1f8] sm:$0xf]
    %v939 = vld [vmem:[#allocation8 + $0x1fc] sm:$0xf]
    %v972 = vunpack.c.l.b16 %v908
    %v973 = vunpack.c.l.b16 %v909
    %v974 = vunpack.c.l.b16 %v910
    %v975 = vunpack.c.l.b16 %v911
    %v976 = vunpack.c.l.b16 %v912
    %v977 = vunpack.c.l.b16 %v913
    %v978 = vunpack.c.l.b16 %v914
    %v979 = vunpack.c.l.b16 %v915
    %v980 = vunpack.c.l.b16 %v916
    %v981 = vunpack.c.l.b16 %v917
    %v982 = vunpack.c.l.b16 %v918
    %v983 = vunpack.c.l.b16 %v919
    %v984 = vunpack.c.l.b16 %v920
    %v985 = vunpack.c.l.b16 %v921
    %v986 = vunpack.c.l.b16 %v922
    %v987 = vunpack.c.l.b16 %v923
    %v988 = vunpack.c.l.b16 %v924
    %v989 = vunpack.c.l.b16 %v925
    %v990 = vunpack.c.l.b16 %v926
    %v991 = vunpack.c.l.b16 %v927
    %v992 = vunpack.c.l.b16 %v928
    %v993 = vunpack.c.l.b16 %v929
    %v994 = vunpack.c.l.b16 %v930
    %v995 = vunpack.c.l.b16 %v931
    %v996 = vunpack.c.l.b16 %v932
    %v997 = vunpack.c.l.b16 %v933
    %v998 = vunpack.c.l.b16 %v934
    %v999 = vunpack.c.l.b16 %v935
    %v1000 = vunpack.c.l.b16 %v936
    %v1001 = vunpack.c.l.b16 %v937
    %v1002 = vunpack.c.l.b16 %v938
    %v1003 = vunpack.c.l.b16 %v939
    %v1004 = vpack.c.b16 %v973, %v972
    %v1005 = vpack.c.b16 %v975, %v974
    %v1006 = vpack.c.b16 %v977, %v976
    %v1007 = vpack.c.b16 %v979, %v978
    %v1008 = vpack.c.b16 %v981, %v980
    %v1009 = vpack.c.b16 %v983, %v982
    %v1010 = vpack.c.b16 %v985, %v984
    %v1011 = vpack.c.b16 %v987, %v986
    %v1012 = vpack.c.b16 %v989, %v988
    %v1013 = vpack.c.b16 %v991, %v990
    %v1014 = vpack.c.b16 %v993, %v992
    %v1015 = vpack.c.b16 %v995, %v994
    %v1016 = vpack.c.b16 %v997, %v996
    %v1017 = vpack.c.b16 %v999, %v998
    %v1018 = vpack.c.b16 %v1001, %v1000
    %v1019 = vpack.c.b16 %v1003, %v1002
    %1036 = vmatprep.subr.bf16.mxu0 0
    %1037 = vmatpush1.bf16.msra.mxu0 %v1004
    %1038 = vmatprep.subr.bf16.mxu0 0
    %1039 = vmatpush1.bf16.msra.mxu0 %v1005
    %1040 = vmatprep.subr.bf16.mxu0 0
    %1041 = vmatpush1.bf16.msra.mxu0 %v1006
    %1042 = vmatprep.subr.bf16.mxu0 0
    %1043 = vmatpush1.bf16.msra.mxu0 %v1007
    %1044 = vmatprep.subr.bf16.mxu0 0
    %1045 = vmatpush1.bf16.msra.mxu0 %v1008
    %1046 = vmatprep.subr.bf16.mxu0 0
    %1047 = vmatpush1.bf16.msra.mxu0 %v1009
    %1048 = vmatprep.subr.bf16.mxu0 0
    %1049 = vmatpush1.bf16.msra.mxu0 %v1010
    %1050 = vmatprep.subr.bf16.mxu0 0
    %1051 = vmatpush1.bf16.msra.mxu0 %v1011
    %1052 = vmatprep.subr.bf16.mxu0 0
    %1053 = vmatpush1.bf16.msra.mxu0 %v1012
    %1054 = vmatprep.subr.bf16.mxu0 0
    %1055 = vmatpush1.bf16.msra.mxu0 %v1013
    %1056 = vmatprep.subr.bf16.mxu0 0
    %1057 = vmatpush1.bf16.msra.mxu0 %v1014
    %1058 = vmatprep.subr.bf16.mxu0 0
    %1059 = vmatpush1.bf16.msra.mxu0 %v1015
    %1060 = vmatprep.subr.bf16.mxu0 0
    %1061 = vmatpush1.bf16.msra.mxu0 %v1016
    %1062 = vmatprep.subr.bf16.mxu0 0
    %1063 = vmatpush1.bf16.msra.mxu0 %v1017
    %1064 = vmatprep.subr.bf16.mxu0 0
    %1065 = vmatpush1.bf16.msra.mxu0 %v1018
    %1066 = vmatprep.subr.bf16.mxu0 0
    %1067 = vmatpush1.bf16.msra.mxu0 %v1019
    %1068 = vmatprep.mubr.bf16.mxu0 %v907
    %1069 = vmatmul.mubr.bf16.gmra.mrb[0].mxu0 %v906
    %v1070 = vpop.f32.mrb[0].mxu0
    %v1071 = vadd.f32 0.0, %v1070
    %v1072 = vpop.f32.mrb[0].mxu0
    %v1073 = vpop.f32.mrb[0].mxu0
    %v1074 = vpop.f32.mrb[0].mxu0
    %1075 = vdwg.mxu0
    %v1076 = vadd.f32 %v826, %v1071
    %v1077 = vld [vmem:[%s4] sm:$0x1]
    %v1079 = vlaneseq
    %v1080 = vshrl.u32 %v1079, 7
    %v1081 = vsub.s32 0, %v1080
    %v1082 = vrot.slane %v1077, %v1081
    %v1084 = vadd.f32 %v1076, %v1082
    %1085 = vst [vmem:[#allocation10] sm:$0xff] %v1084
    // Predicated region
    $region38: #{tpu_custom_call.1} parent=1 // pred_check
      _
    $region39: #{tpu_custom_call.1} parent=1 // pred_check_branch
      %1087 = sbr.rel (0) target = $region41
    $region40: #{tpu_custom_call.1} parent=1 // pred_region
      %s1089 = ssub.s32 128, 128
      %1090 = vsyncadd [#allocation4], %s1089
      %s1092 = sshll.u32 [#allocation10], 4
      %s1093 = int_to_ptr.vmem [resolvable:$true] %s1092
      %1095 = dma.vmem_to_hbm [thread:$0]  %s1093, 128, %s5, [#allocation4]
    $region41: #{tpu_custom_call.1} parent=1 // pred_fallthru
      _
    // Predicated region
    $region42: #{tpu_custom_call.1} parent=1 // pred_check
      _
    $region43: #{tpu_custom_call.1} parent=1 // pred_check_branch
      %1097 = sbr.rel (0) target = $region45
    $region44: #{tpu_custom_call.1} parent=1 // pred_region
      %1098 = dma.done [#allocation4], 128
    $region45: #{tpu_custom_call.1} parent=1 // pred_fallthru
      _
    %1099 = vsyncpa [#allocation3], 1
    %1100 = vsyncpa [#allocation6], 1
    %1101 = vsyncpa [#allocation9], 1
    %1102 = vsyncpa [#allocation4], 1

// kernel: tpu_custom_call.1
$region0: #{tpu_custom_call.1}
  #allocation0 [shape = 'u32[]', space=smem, size = 0x4, offset = 0x4, fixed_abs, tag = 'smem constant byte address 0x4 - core index']
  #allocation1 [shape = 'u32[144,128]{1,0:T(1,128)}', space=vmem, size = 0x12000, scoped, tag = 'internal scratch']
  %s0 = inlined_call_operand.hbm [shape: f32[8,32], index: 0, kind: input, shape index: {}]
  %s1 = inlined_call_operand.hbm [shape: bf16[32,1024], index: 1, kind: input, shape index: {}]
  %s2 = inlined_call_operand.hbm [shape: f32[1,1024], index: 2, kind: input, shape index: {}]
  %s3 = inlined_call_operand.hbm [shape: bf16[1024,128], index: 3, kind: input, shape index: {}]
  %s4 = inlined_call_operand.vmem [shape: f32[1,128], index: 4, kind: input, shape index: {}]
  %s5 = inlined_call_operand.hbm [shape: f32[8,128], index: 5, kind: output, shape index: {}]
  %s6 = sld [smem:[#allocation0]]
  $region46: #{tpu_custom_call.1} parent=0
    _
  %s8 = ssub.s32 1, %s6
  %s9 = scalar_select 0, %s8, %s6
  $region1: #{tpu_custom_call.1} parent=0
    #allocation2 [shape = 'u8[4096]{0}', space=vmem, size = 0x1000, scoped, tag = 'input window, operand 0, single buffered']
    #allocation3 [shape = 's32[1]{0}', space=sflag, size = 0x4, scoped, tag = 'scoped memory for tpu_custom_call.1']
    #allocation4 [shape = 's32[1]{0}', space=sflag, size = 0x4, scoped, tag = 'scoped memory for tpu_custom_call.1']
    #allocation5 [shape = 'u8[65536]{0}', space=vmem, size = 0x10000, scoped, tag = 'input window, operand 1, single buffered']
    #allocation6 [shape = 's32[1]{0}', space=sflag, size = 0x4, scoped, tag = 'scoped memory for tpu_custom_call.1']
    #allocation7 [shape = 'u8[4096]{0}', space=vmem, size = 0x1000, scoped, tag = 'input window, operand 2, single buffered']
    #allocation8 [shape = 'u8[262144]{0}', space=vmem, size = 0x40000, scoped, tag = 'input window, operand 3, single buffered']
    #allocation9 [shape = 's32[1]{0}', space=sflag, size = 0x4, scoped, tag = 'scoped memory for tpu_custom_call.1']
    #allocation10 [shape = 'u8[4096]{0}', space=vmem, size = 0x1000, scoped, tag = 'output window, operand 0, single buffered']
    %10 = vsyncpa [#allocation3], 0
    %11 = vsyncpa [#allocation6], 0
    %12 = vsyncpa [#allocation9], 0
    %13 = vsyncpa [#allocation4], 0
    // Predicated region
    $region2: #{tpu_custom_call.1} parent=1 // pred_check
      _
    $region3: #{tpu_custom_call.1} parent=1 // pred_check_branch
      %15 = sbr.rel (0) target = $region5
    $region4: #{tpu_custom_call.1} parent=1 // pred_region
      %s17 = ssub.s32 128, 128
      %18 = vsyncadd [#allocation3], %s17
      %s20 = sshll.u32 [#allocation2], 4
      %s21 = int_to_ptr.vmem [resolvable:$true] %s20
      %23 = dma.hbm_to_vmem [thread:$0]  %s0, 128, %s21, [#allocation3]
    $region5: #{tpu_custom_call.1} parent=1 // pred_fallthru
      _
    // Predicated region
    $region6: #{tpu_custom_call.1} parent=1 // pred_check
      _
    $region7: #{tpu_custom_call.1} parent=1 // pred_check_branch
      %25 = sbr.rel (0) target = $region9
    $region8: #{tpu_custom_call.1} parent=1 // pred_region
      %s27 = ssub.s32 2048, 2048
      %28 = vsyncadd [#allocation6], %s27
      %s29 = sshll.u32 [#allocation5], 4
      %s30 = int_to_ptr.vmem [resolvable:$true] %s29
      %35 = dma.hbm_to_vmem [thread:$0]  %s1, 2048, %s30, [#allocation6], 512, 512, 32
    $region9: #{tpu_custom_call.1} parent=1 // pred_fallthru
      _
    // Predicated region
    $region10: #{tpu_custom_call.1} parent=1 // pred_check
      _
    $region11: #{tpu_custom_call.1} parent=1 // pred_check_branch
      %37 = sbr.rel (0) target = $region13
    $region12: #{tpu_custom_call.1} parent=1 // pred_region
      %s39 = ssub.s32 128, 128
      %40 = vsyncadd [#allocation6], %s39
      %s42 = sshll.u32 [#allocation7], 4
      %s43 = int_to_ptr.vmem [resolvable:$true] %s42
      %45 = dma.hbm_to_vmem [thread:$0]  %s2, 128, %s43, [#allocation6]
    $region13: #{tpu_custom_call.1} parent=1 // pred_fallthru
      _
    // Predicated region
    $region14: #{tpu_custom_call.1} parent=1 // pred_check
      _
    $region15: #{tpu_custom_call.1} parent=1 // pred_check_branch
      %47 = sbr.rel (0) target = $region17
    $region16: #{tpu_custom_call.1} parent=1 // pred_region
      %s49 = ssub.s32 8192, 8192
      %50 = vsyncadd [#allocation9], %s49
      %s51 = sshll.u32 [#allocation8], 4
      %s52 = int_to_ptr.vmem [resolvable:$true] %s51
      %57 = dma.hbm_to_vmem [thread:$0]  %s3, 8192, %s52, [#allocation9], 64, 64, 4
    $region17: #{tpu_custom_call.1} parent=1 // pred_fallthru
      _
    // Predicated region
    $region18: #{tpu_custom_call.1} parent=1 // pred_check
      _
    $region19: #{tpu_custom_call.1} parent=1 // pred_check_branch
      %59 = sbr.rel (0) target = $region21
    $region20: #{tpu_custom_call.1} parent=1 // pred_region
      _
    $region21: #{tpu_custom_call.1} parent=1 // pred_fallthru
      _
    // Predicated region
    $region22: #{tpu_custom_call.1} parent=1 // pred_check
      _
    $region23: #{tpu_custom_call.1} parent=1 // pred_check_branch
      %61 = sbr.rel (0) target = $region25
    $region24: #{tpu_custom_call.1} parent=1 // pred_region
      %62 = dma.done [#allocation3], 128
    $region25: #{tpu_custom_call.1} parent=1 // pred_fallthru
      _
    // Predicated region
    $region26: #{tpu_custom_call.1} parent=1 // pred_check
      _
    $region27: #{tpu_custom_call.1} parent=1 // pred_check_branch
      %64 = sbr.rel (0) target = $region29
    $region28: #{tpu_custom_call.1} parent=1 // pred_region
      %65 = dma.done [#allocation6], 2048
    $region29: #{tpu_custom_call.1} parent=1 // pred_fallthru
      _
    // Predicated region
    $region30: #{tpu_custom_call.1} parent=1 // pred_check
      _
    $region31: #{tpu_custom_call.1} parent=1 // pred_check_branch
      %67 = sbr.rel (0) target = $region33
    $region32: #{tpu_custom_call.1} parent=1 // pred_region
      %68 = dma.done [#allocation6], 128
    $region33: #{tpu_custom_call.1} parent=1 // pred_fallthru
      _
    // Predicated region
    $region34: #{tpu_custom_call.1} parent=1 // pred_check
      _
    $region35: #{tpu_custom_call.1} parent=1 // pred_check_branch
      %70 = sbr.rel (0) target = $region37
    $region36: #{tpu_custom_call.1} parent=1 // pred_region
      %71 = dma.done [#allocation9], 8192
    $region37: #{tpu_custom_call.1} parent=1 // pred_fallthru
      _
    %v73 = vld [vmem:[#allocation2] sm:$0xff]
    %v74 = vpack.c.bf16 %v73, %v73
    %v75 = vld [vmem:[#allocation5] sm:$0xff]
    %v76 = vld [vmem:[#allocation5 + $0x20] sm:$0xff]
    %v77 = vld [vmem:[#allocation5 + $0x40] sm:$0xff]
    %v78 = vld [vmem:[#allocation5 + $0x60] sm:$0xff]
    %v79 = vld [vmem:[#allocation7] sm:$0x3]
    %v81 = vlaneseq
    %v82 = vshrl.u32 %v81, 7
    %v83 = vsub.s32 0, %v82
    %v84 = vrot.slane %v79, %v83
    %v85 = vlaneseq
    %v86 = vshrl.u32 %v85, 7
    %v87 = vsub.s32 1, %v86
    %v88 = vrot.slane %v79, %v87
    %v95 = vunpack.c.l.b16 %v75
    %v96 = vunpack.c.h.b16 %v75
    %v97 = vunpack.c.l.b16 %v76
    %v98 = vunpack.c.h.b16 %v76
    %v99 = vunpack.c.l.b16 %v77
    %v100 = vunpack.c.h.b16 %v77
    %v101 = vunpack.c.l.b16 %v78
    %v102 = vunpack.c.h.b16 %v78
    %v103 = vpack.c.b16 %v97, %v95
    %v104 = vpack.c.b16 %v98, %v96
    %v105 = vpack.c.b16 %v101, %v99
    %v106 = vpack.c.b16 %v102, %v100
    %vm111 = vcmask 261120
    %v113 = vsel %vm111, %v74, 0
    %115 = vmatprep.subr.bf16.mxu0 %v104
    %116 = vmatpush1.bf16.msra.mxu0 %v103
    %117 = vmatprep.subr.bf16.mxu0 %v106
    %118 = vmatpush1.bf16.msra.mxu0 %v105
    %119 = vmatprep.subr.bf16.mxu0 0
    %120 = vmatpush1.bf16.msra.mxu0 0
    %121 = vmatprep.subr.bf16.mxu0 0
    %122 = vmatpush1.bf16.msra.mxu0 0
    %123 = vmatprep.subr.bf16.mxu0 0
    %124 = vmatpush1.bf16.msra.mxu0 0
    %125 = vmatprep.subr.bf16.mxu0 0
    %126 = vmatpush1.bf16.msra.mxu0 0
    %127 = vmatprep.subr.bf16.mxu0 0
    %128 = vmatpush1.bf16.msra.mxu0 0
    %129 = vmatprep.subr.bf16.mxu0 0
    %130 = vmatpush1.bf16.msra.mxu0 0
    %131 = vmatprep.subr.bf16.mxu0 0
    %132 = vmatpush1.bf16.msra.mxu0 0
    %133 = vmatprep.subr.bf16.mxu0 0
    %134 = vmatpush1.bf16.msra.mxu0 0
    %135 = vmatprep.subr.bf16.mxu0 0
    %136 = vmatpush1.bf16.msra.mxu0 0
    %137 = vmatprep.subr.bf16.mxu0 0
    %138 = vmatpush1.bf16.msra.mxu0 0
    %139 = vmatprep.subr.bf16.mxu0 0
    %140 = vmatpush1.bf16.msra.mxu0 0
    %141 = vmatprep.subr.bf16.mxu0 0
    %142 = vmatpush1.bf16.msra.mxu0 0
    %143 = vmatprep.subr.bf16.mxu0 0
    %144 = vmatpush1.bf16.msra.mxu0 0
    %145 = vmatprep.subr.bf16.mxu0 0
    %146 = vmatpush1.bf16.msra.mxu0 0
    %147 = vmatprep.mubr.bf16.mxu0 0
    %148 = vmatmul.mubr.bf16.gmra.mrb[0].mxu0 %v113
    %v149 = vpop.f32.mrb[0].mxu0
    %v150 = vadd.f32 %v84, %v149
    %v151 = vpop.f32.mrb[0].mxu0
    %v152 = vadd.f32 %v88, %v151
    %v153 = vpop.f32.mrb[0].mxu0
    %v154 = vpop.f32.mrb[0].mxu0
    %155 = vdwg.mxu0
    %v156 = vmax.f32 %v150, 0.0
    %v157 = vmax.f32 %v152, 0.0
    %v158 = vpack.c.bf16 %v156, %v156
    %v159 = vpack.c.bf16 %v157, %v157
    %v160 = vld [vmem:[#allocation8] sm:$0xf]
    %v161 = vld [vmem:[#allocation8 + $0x4] sm:$0xf]
    %v162 = vld [vmem:[#allocation8 + $0x8] sm:$0xf]
    %v163 = vld [vmem:[#allocation8 + $0xc] sm:$0xf]
    %v164 = vld [vmem:[#allocation8 + $0x10] sm:$0xf]
    %v165 = vld [vmem:[#allocation8 + $0x14] sm:$0xf]
    %v166 = vld [vmem:[#allocation8 + $0x18] sm:$0xf]
    %v167 = vld [vmem:[#allocation8 + $0x1c] sm:$0xf]
    %v168 = vld [vmem:[#allocation8 + $0x20] sm:$0xf]
    %v169 = vld [vmem:[#allocation8 + $0x24] sm:$0xf]
    %v170 = vld [vmem:[#allocation8 + $0x28] sm:$0xf]
    %v171 = vld [vmem:[#allocation8 + $0x2c] sm:$0xf]
    %v172 = vld [vmem:[#allocation8 + $0x30] sm:$0xf]
    %v173 = vld [vmem:[#allocation8 + $0x34] sm:$0xf]
    %v174 = vld [vmem:[#allocation8 + $0x38] sm:$0xf]
    %v175 = vld [vmem:[#allocation8 + $0x3c] sm:$0xf]
    %v176 = vld [vmem:[#allocation8 + $0x40] sm:$0xf]
    %v177 = vld [vmem:[#allocation8 + $0x44] sm:$0xf]
    %v178 = vld [vmem:[#allocation8 + $0x48] sm:$0xf]
    %v179 = vld [vmem:[#allocation8 + $0x4c] sm:$0xf]
    %v180 = vld [vmem:[#allocation8 + $0x50] sm:$0xf]
    %v181 = vld [vmem:[#allocation8 + $0x54] sm:$0xf]
    %v182 = vld [vmem:[#allocation8 + $0x58] sm:$0xf]
    %v183 = vld [vmem:[#allocation8 + $0x5c] sm:$0xf]
    %v184 = vld [vmem:[#allocation8 + $0x60] sm:$0xf]
    %v185 = vld [vmem:[#allocation8 + $0x64] sm:$0xf]
    %v186 = vld [vmem:[#allocation8 + $0x68] sm:$0xf]
    %v187 = vld [vmem:[#allocation8 + $0x6c] sm:$0xf]
    %v188 = vld [vmem:[#allocation8 + $0x70] sm:$0xf]
    %v189 = vld [vmem:[#allocation8 + $0x74] sm:$0xf]
    %v190 = vld [vmem:[#allocation8 + $0x78] sm:$0xf]
    %v191 = vld [vmem:[#allocation8 + $0x7c] sm:$0xf]
    %v192 = vld [vmem:[#allocation5 + $0x8] sm:$0xff]
    %v193 = vld [vmem:[#allocation5 + $0x28] sm:$0xff]
    %v194 = vld [vmem:[#allocation5 + $0x48] sm:$0xff]
    %v195 = vld [vmem:[#allocation5 + $0x68] sm:$0xff]
    %v196 = vld [vmem:[#allocation7 + $0x2] sm:$0x3]
    %v198 = vlaneseq
    %v199 = vshrl.u32 %v198, 7
    %v200 = vsub.s32 0, %v199
    %v201 = vrot.slane %v196, %v200
    %v202 = vlaneseq
    %v203 = vshrl.u32 %v202, 7
    %v204 = vsub.s32 1, %v203
    %v205 = vrot.slane %v196, %v204
    %v212 = vunpack.c.l.b16 %v192
    %v213 = vunpack.c.h.b16 %v192
    %v214 = vunpack.c.l.b16 %v193
    %v215 = vunpack.c.h.b16 %v193
    %v216 = vunpack.c.l.b16 %v194
    %v217 = vunpack.c.h.b16 %v194
    %v218 = vunpack.c.l.b16 %v195
    %v219 = vunpack.c.h.b16 %v195
    %v220 = vpack.c.b16 %v214, %v212
    %v221 = vpack.c.b16 %v215, %v213
    %v222 = vpack.c.b16 %v218, %v216
    %v223 = vpack.c.b16 %v219, %v217
    %228 = vmatprep.subr.bf16.mxu0 %v221
    %229 = vmatpush1.bf16.msra.mxu0 %v220
    %230 = vmatprep.subr.bf16.mxu0 %v223
    %231 = vmatpush1.bf16.msra.mxu0 %v222
    %232 = vmatprep.subr.bf16.mxu0 0
    %233 = vmatpush1.bf16.msra.mxu0 0
    %234 = vmatprep.subr.bf16.mxu0 0
    %235 = vmatpush1.bf16.msra.mxu0 0
    %236 = vmatprep.subr.bf16.mxu0 0
    %237 = vmatpush1.bf16.msra.mxu0 0
    %238 = vmatprep.subr.bf16.mxu0 0
    %239 = vmatpush1.bf16.msra.mxu0 0
    %240 = vmatprep.subr.bf16.mxu0 0
    %241 = vmatpush1.bf16.msra.mxu0 0
    %242 = vmatprep.subr.bf16.mxu0 0
    %243 = vmatpush1.bf16.msra.mxu0 0
    %244 = vmatprep.subr.bf16.mxu0 0
    %245 = vmatpush1.bf16.msra.mxu0 0
    %246 = vmatprep.subr.bf16.mxu0 0
    %247 = vmatpush1.bf16.msra.mxu0 0
    %248 = vmatprep.subr.bf16.mxu0 0
    %249 = vmatpush1.bf16.msra.mxu0 0
    %250 = vmatprep.subr.bf16.mxu0 0
    %251 = vmatpush1.bf16.msra.mxu0 0
    %252 = vmatprep.subr.bf16.mxu0 0
    %253 = vmatpush1.bf16.msra.mxu0 0
    %254 = vmatprep.subr.bf16.mxu0 0
    %255 = vmatpush1.bf16.msra.mxu0 0
    %256 = vmatprep.subr.bf16.mxu0 0
    %257 = vmatpush1.bf16.msra.mxu0 0
    %258 = vmatprep.subr.bf16.mxu0 0
    %259 = vmatpush1.bf16.msra.mxu0 0
    %260 = vmatprep.mubr.bf16.mxu0 0
    %261 = vmatmul.mubr.bf16.gmra.mrb[0].mxu0 %v113
    %v262 = vpop.f32.mrb[0].mxu0
    %v263 = vadd.f32 %v201, %v262
    %v264 = vpop.f32.mrb[0].mxu0
    %v265 = vadd.f32 %v205, %v264
    %v266 = vpop.f32.mrb[0].mxu0
    %v267 = vpop.f32.mrb[0].mxu0
    %268 = vdwg.mxu0
    %v269 = vmax.f32 %v263, 0.0
    %v270 = vmax.f32 %v265, 0.0
    %v271 = vpack.c.bf16 %v269, %v269
    %v272 = vpack.c.bf16 %v270, %v270
    %v273 = vld [vmem:[#allocation8 + $0x80] sm:$0xf]
    %v274 = vld [vmem:[#allocation8 + $0x84] sm:$0xf]
    %v275 = vld [vmem:[#allocation8 + $0x88] sm:$0xf]
    %v276 = vld [vmem:[#allocation8 + $0x8c] sm:$0xf]
    %v277 = vld [vmem:[#allocation8 + $0x90] sm:$0xf]
    %v278 = vld [vmem:[#allocation8 + $0x94] sm:$0xf]
    %v279 = vld [vmem:[#allocation8 + $0x98] sm:$0xf]
    %v280 = vld [vmem:[#allocation8 + $0x9c] sm:$0xf]
    %v281 = vld [vmem:[#allocation8 + $0xa0] sm:$0xf]
    %v282 = vld [vmem:[#allocation8 + $0xa4] sm:$0xf]
    %v283 = vld [vmem:[#allocation8 + $0xa8] sm:$0xf]
    %v284 = vld [vmem:[#allocation8 + $0xac] sm:$0xf]
    %v285 = vld [vmem:[#allocation8 + $0xb0] sm:$0xf]
    %v286 = vld [vmem:[#allocation8 + $0xb4] sm:$0xf]
    %v287 = vld [vmem:[#allocation8 + $0xb8] sm:$0xf]
    %v288 = vld [vmem:[#allocation8 + $0xbc] sm:$0xf]
    %v289 = vld [vmem:[#allocation8 + $0xc0] sm:$0xf]
    %v290 = vld [vmem:[#allocation8 + $0xc4] sm:$0xf]
    %v291 = vld [vmem:[#allocation8 + $0xc8] sm:$0xf]
    %v292 = vld [vmem:[#allocation8 + $0xcc] sm:$0xf]
    %v293 = vld [vmem:[#allocation8 + $0xd0] sm:$0xf]
    %v294 = vld [vmem:[#allocation8 + $0xd4] sm:$0xf]
    %v295 = vld [vmem:[#allocation8 + $0xd8] sm:$0xf]
    %v296 = vld [vmem:[#allocation8 + $0xdc] sm:$0xf]
    %v297 = vld [vmem:[#allocation8 + $0xe0] sm:$0xf]
    %v298 = vld [vmem:[#allocation8 + $0xe4] sm:$0xf]
    %v299 = vld [vmem:[#allocation8 + $0xe8] sm:$0xf]
    %v300 = vld [vmem:[#allocation8 + $0xec] sm:$0xf]
    %v301 = vld [vmem:[#allocation8 + $0xf0] sm:$0xf]
    %v302 = vld [vmem:[#allocation8 + $0xf4] sm:$0xf]
    %v303 = vld [vmem:[#allocation8 + $0xf8] sm:$0xf]
    %v304 = vld [vmem:[#allocation8 + $0xfc] sm:$0xf]
    %v337 = vunpack.c.l.b16 %v273
    %v338 = vunpack.c.l.b16 %v274
    %v339 = vunpack.c.l.b16 %v275
    %v340 = vunpack.c.l.b16 %v276
    %v341 = vunpack.c.l.b16 %v277
    %v342 = vunpack.c.l.b16 %v278
    %v343 = vunpack.c.l.b16 %v279
    %v344 = vunpack.c.l.b16 %v280
    %v345 = vunpack.c.l.b16 %v281
    %v346 = vunpack.c.l.b16 %v282
    %v347 = vunpack.c.l.b16 %v283
    %v348 = vunpack.c.l.b16 %v284
    %v349 = vunpack.c.l.b16 %v285
    %v350 = vunpack.c.l.b16 %v286
    %v351 = vunpack.c.l.b16 %v287
    %v352 = vunpack.c.l.b16 %v288
    %v353 = vunpack.c.l.b16 %v289
    %v354 = vunpack.c.l.b16 %v290
    %v355 = vunpack.c.l.b16 %v291
    %v356 = vunpack.c.l.b16 %v292
    %v357 = vunpack.c.l.b16 %v293
    %v358 = vunpack.c.l.b16 %v294
    %v359 = vunpack.c.l.b16 %v295
    %v360 = vunpack.c.l.b16 %v296
    %v361 = vunpack.c.l.b16 %v297
    %v362 = vunpack.c.l.b16 %v298
    %v363 = vunpack.c.l.b16 %v299
    %v364 = vunpack.c.l.b16 %v300
    %v365 = vunpack.c.l.b16 %v301
    %v366 = vunpack.c.l.b16 %v302
    %v367 = vunpack.c.l.b16 %v303
    %v368 = vunpack.c.l.b16 %v304
    %v369 = vpack.c.b16 %v338, %v337
    %v370 = vpack.c.b16 %v340, %v339
    %v371 = vpack.c.b16 %v342, %v341
    %v372 = vpack.c.b16 %v344, %v343
    %v373 = vpack.c.b16 %v346, %v345
    %v374 = vpack.c.b16 %v348, %v347
    %v375 = vpack.c.b16 %v350, %v349
    %v376 = vpack.c.b16 %v352, %v351
    %v377 = vpack.c.b16 %v354, %v353
    %v378 = vpack.c.b16 %v356, %v355
    %v379 = vpack.c.b16 %v358, %v357
    %v380 = vpack.c.b16 %v360, %v359
    %v381 = vpack.c.b16 %v362, %v361
    %v382 = vpack.c.b16 %v364, %v363
    %v383 = vpack.c.b16 %v366, %v365
    %v384 = vpack.c.b16 %v368, %v367
    %401 = vmatprep.subr.bf16.mxu0 0
    %402 = vmatpush1.bf16.msra.mxu0 %v369
    %403 = vmatprep.subr.bf16.mxu0 0
    %404 = vmatpush1.bf16.msra.mxu0 %v370
    %405 = vmatprep.subr.bf16.mxu0 0
    %406 = vmatpush1.bf16.msra.mxu0 %v371
    %407 = vmatprep.subr.bf16.mxu0 0
    %408 = vmatpush1.bf16.msra.mxu0 %v372
    %409 = vmatprep.subr.bf16.mxu0 0
    %410 = vmatpush1.bf16.msra.mxu0 %v373
    %411 = vmatprep.subr.bf16.mxu0 0
    %412 = vmatpush1.bf16.msra.mxu0 %v374
    %413 = vmatprep.subr.bf16.mxu0 0
    %414 = vmatpush1.bf16.msra.mxu0 %v375
    %415 = vmatprep.subr.bf16.mxu0 0
    %416 = vmatpush1.bf16.msra.mxu0 %v376
    %417 = vmatprep.subr.bf16.mxu0 0
    %418 = vmatpush1.bf16.msra.mxu0 %v377
    %419 = vmatprep.subr.bf16.mxu0 0
    %420 = vmatpush1.bf16.msra.mxu0 %v378
    %421 = vmatprep.subr.bf16.mxu0 0
    %422 = vmatpush1.bf16.msra.mxu0 %v379
    %423 = vmatprep.subr.bf16.mxu0 0
    %424 = vmatpush1.bf16.msra.mxu0 %v380
    %425 = vmatprep.subr.bf16.mxu0 0
    %426 = vmatpush1.bf16.msra.mxu0 %v381
    %427 = vmatprep.subr.bf16.mxu0 0
    %428 = vmatpush1.bf16.msra.mxu0 %v382
    %429 = vmatprep.subr.bf16.mxu0 0
    %430 = vmatpush1.bf16.msra.mxu0 %v383
    %431 = vmatprep.subr.bf16.mxu0 0
    %432 = vmatpush1.bf16.msra.mxu0 %v384
    %433 = vmatprep.mubr.bf16.mxu0 %v272
    %434 = vmatmul.mubr.bf16.gmra.mrb[0].mxu0 %v271
    %v435 = vpop.f32.mrb[0].mxu0
    %v436 = vadd.f32 0.0, %v435
    %v437 = vpop.f32.mrb[0].mxu0
    %v438 = vpop.f32.mrb[0].mxu0
    %v439 = vpop.f32.mrb[0].mxu0
    %440 = vdwg.mxu0
    %v473 = vunpack.c.l.b16 %v160
    %v474 = vunpack.c.l.b16 %v161
    %v475 = vunpack.c.l.b16 %v162
    %v476 = vunpack.c.l.b16 %v163
    %v477 = vunpack.c.l.b16 %v164
    %v478 = vunpack.c.l.b16 %v165
    %v479 = vunpack.c.l.b16 %v166
    %v480 = vunpack.c.l.b16 %v167
    %v481 = vunpack.c.l.b16 %v168
    %v482 = vunpack.c.l.b16 %v169
    %v483 = vunpack.c.l.b16 %v170
    %v484 = vunpack.c.l.b16 %v171
    %v485 = vunpack.c.l.b16 %v172
    %v486 = vunpack.c.l.b16 %v173
    %v487 = vunpack.c.l.b16 %v174
    %v488 = vunpack.c.l.b16 %v175
    %v489 = vunpack.c.l.b16 %v176
    %v490 = vunpack.c.l.b16 %v177
    %v491 = vunpack.c.l.b16 %v178
    %v492 = vunpack.c.l.b16 %v179
    %v493 = vunpack.c.l.b16 %v180
    %v494 = vunpack.c.l.b16 %v181
    %v495 = vunpack.c.l.b16 %v182
    %v496 = vunpack.c.l.b16 %v183
    %v497 = vunpack.c.l.b16 %v184
    %v498 = vunpack.c.l.b16 %v185
    %v499 = vunpack.c.l.b16 %v186
    %v500 = vunpack.c.l.b16 %v187
    %v501 = vunpack.c.l.b16 %v188
    %v502 = vunpack.c.l.b16 %v189
    %v503 = vunpack.c.l.b16 %v190
    %v504 = vunpack.c.l.b16 %v191
    %v505 = vpack.c.b16 %v474, %v473
    %v506 = vpack.c.b16 %v476, %v475
    %v507 = vpack.c.b16 %v478, %v477
    %v508 = vpack.c.b16 %v480, %v479
    %v509 = vpack.c.b16 %v482, %v481
    %v510 = vpack.c.b16 %v484, %v483
    %v511 = vpack.c.b16 %v486, %v485
    %v512 = vpack.c.b16 %v488, %v487
    %v513 = vpack.c.b16 %v490, %v489
    %v514 = vpack.c.b16 %v492, %v491
    %v515 = vpack.c.b16 %v494, %v493
    %v516 = vpack.c.b16 %v496, %v495
    %v517 = vpack.c.b16 %v498, %v497
    %v518 = vpack.c.b16 %v500, %v499
    %v519 = vpack.c.b16 %v502, %v501
    %v520 = vpack.c.b16 %v504, %v503
    %537 = vmatprep.subr.bf16.mxu0 0
    %538 = vmatpush1.bf16.msra.mxu0 %v505
    %539 = vmatprep.subr.bf16.mxu0 0
    %540 = vmatpush1.bf16.msra.mxu0 %v506
    %541 = vmatprep.subr.bf16.mxu0 0
    %542 = vmatpush1.bf16.msra.mxu0 %v507
    %543 = vmatprep.subr.bf16.mxu0 0
    %544 = vmatpush1.bf16.msra.mxu0 %v508
    %545 = vmatprep.subr.bf16.mxu0 0
    %546 = vmatpush1.bf16.msra.mxu0 %v509
    %547 = vmatprep.subr.bf16.mxu0 0
    %548 = vmatpush1.bf16.msra.mxu0 %v510
    %549 = vmatprep.subr.bf16.mxu0 0
    %550 = vmatpush1.bf16.msra.mxu0 %v511
    %551 = vmatprep.subr.bf16.mxu0 0
    %552 = vmatpush1.bf16.msra.mxu0 %v512
    %553 = vmatprep.subr.bf16.mxu0 0
    %554 = vmatpush1.bf16.msra.mxu0 %v513
    %555 = vmatprep.subr.bf16.mxu0 0
    %556 = vmatpush1.bf16.msra.mxu0 %v514
    %557 = vmatprep.subr.bf16.mxu0 0
    %558 = vmatpush1.bf16.msra.mxu0 %v515
    %559 = vmatprep.subr.bf16.mxu0 0
    %560 = vmatpush1.bf16.msra.mxu0 %v516
    %561 = vmatprep.subr.bf16.mxu0 0
    %562 = vmatpush1.bf16.msra.mxu0 %v517
    %563 = vmatprep.subr.bf16.mxu0 0
    %564 = vmatpush1.bf16.msra.mxu0 %v518
    %565 = vmatprep.subr.bf16.mxu0 0
    %566 = vmatpush1.bf16.msra.mxu0 %v519
    %567 = vmatprep.subr.bf16.mxu0 0
    %568 = vmatpush1.bf16.msra.mxu0 %v520
    %569 = vmatprep.mubr.bf16.mxu0 %v159
    %570 = vmatmul.mubr.bf16.gmra.mrb[0].mxu0 %v158
    %v571 = vpop.f32.mrb[0].mxu0
    %v572 = vadd.f32 %v436, %v571
    %v573 = vpop.f32.mrb[0].mxu0
    %v574 = vpop.f32.mrb[0].mxu0
    %v575 = vpop.f32.mrb[0].mxu0
    %576 = vdwg.mxu0
    %v577 = vld [vmem:[#allocation5 + $0x10] sm:$0xff]
    %v578 = vld [vmem:[#allocation5 + $0x30] sm:$0xff]
    %v579 = vld [vmem:[#allocation5 + $0x50] sm:$0xff]
    %v580 = vld [vmem:[#allocation5 + $0x70] sm:$0xff]
    %v581 = vld [vmem:[#allocation7 + $0x4] sm:$0x3]
    %v583 = vlaneseq
    %v584 = vshrl.u32 %v583, 7
    %v585 = vsub.s32 0, %v584
    %v586 = vrot.slane %v581, %v585
    %v587 = vlaneseq
    %v588 = vshrl.u32 %v587, 7
    %v589 = vsub.s32 1, %v588
    %v590 = vrot.slane %v581, %v589
    %v597 = vunpack.c.l.b16 %v577
    %v598 = vunpack.c.h.b16 %v577
    %v599 = vunpack.c.l.b16 %v578
    %v600 = vunpack.c.h.b16 %v578
    %v601 = vunpack.c.l.b16 %v579
    %v602 = vunpack.c.h.b16 %v579
    %v603 = vunpack.c.l.b16 %v580
    %v604 = vunpack.c.h.b16 %v580
    %v605 = vpack.c.b16 %v599, %v597
    %v606 = vpack.c.b16 %v600, %v598
    %v607 = vpack.c.b16 %v603, %v601
    %v608 = vpack.c.b16 %v604, %v602
    %613 = vmatprep.subr.bf16.mxu0 %v606
    %614 = vmatpush1.bf16.msra.mxu0 %v605
    %615 = vmatprep.subr.bf16.mxu0 %v608
    %616 = vmatpush1.bf16.msra.mxu0 %v607
    %617 = vmatprep.subr.bf16.mxu0 0
    %618 = vmatpush1.bf16.msra.mxu0 0
    %619 = vmatprep.subr.bf16.mxu0 0
    %620 = vmatpush1.bf16.msra.mxu0 0
    %621 = vmatprep.subr.bf16.mxu0 0
    %622 = vmatpush1.bf16.msra.mxu0 0
    %623 = vmatprep.subr.bf16.mxu0 0
    %624 = vmatpush1.bf16.msra.mxu0 0
    %625 = vmatprep.subr.bf16.mxu0 0
    %626 = vmatpush1.bf16.msra.mxu0 0
    %627 = vmatprep.subr.bf16.mxu0 0
    %628 = vmatpush1.bf16.msra.mxu0 0
    %629 = vmatprep.subr.bf16.mxu0 0
    %630 = vmatpush1.bf16.msra.mxu0 0
    %631 = vmatprep.subr.bf16.mxu0 0
    %632 = vmatpush1.bf16.msra.mxu0 0
    %633 = vmatprep.subr.bf16.mxu0 0
    %634 = vmatpush1.bf16.msra.mxu0 0
    %635 = vmatprep.subr.bf16.mxu0 0
    %636 = vmatpush1.bf16.msra.mxu0 0
    %637 = vmatprep.subr.bf16.mxu0 0
    %638 = vmatpush1.bf16.msra.mxu0 0
    %639 = vmatprep.subr.bf16.mxu0 0
    %640 = vmatpush1.bf16.msra.mxu0 0
    %641 = vmatprep.subr.bf16.mxu0 0
    %642 = vmatpush1.bf16.msra.mxu0 0
    %643 = vmatprep.subr.bf16.mxu0 0
    %644 = vmatpush1.bf16.msra.mxu0 0
    %645 = vmatprep.mubr.bf16.mxu0 0
    %646 = vmatmul.mubr.bf16.gmra.mrb[0].mxu0 %v113
    %v647 = vpop.f32.mrb[0].mxu0
    %v648 = vadd.f32 %v586, %v647
    %v649 = vpop.f32.mrb[0].mxu0
    %v650 = vadd.f32 %v590, %v649
    %v651 = vpop.f32.mrb[0].mxu0
    %v652 = vpop.f32.mrb[0].mxu0
    %653 = vdwg.mxu0
    %v654 = vmax.f32 %v648, 0.0
    %v655 = vmax.f32 %v650, 0.0
    %v656 = vpack.c.bf16 %v654, %v654
    %v657 = vpack.c.bf16 %v655, %v655
    %v658 = vld [vmem:[#allocation8 + $0x100] sm:$0xf]
    %v659 = vld [vmem:[#allocation8 + $0x104] sm:$0xf]
    %v660 = vld [vmem:[#allocation8 + $0x108] sm:$0xf]
    %v661 = vld [vmem:[#allocation8 + $0x10c] sm:$0xf]
    %v662 = vld [vmem:[#allocation8 + $0x110] sm:$0xf]
    %v663 = vld [vmem:[#allocation8 + $0x114] sm:$0xf]
    %v664 = vld [vmem:[#allocation8 + $0x118] sm:$0xf]
    %v665 = vld [vmem:[#allocation8 + $0x11c] sm:$0xf]
    %v666 = vld [vmem:[#allocation8 + $0x120] sm:$0xf]
    %v667 = vld [vmem:[#allocation8 + $0x124] sm:$0xf]
    %v668 = vld [vmem:[#allocation8 + $0x128] sm:$0xf]
    %v669 = vld [vmem:[#allocation8 + $0x12c] sm:$0xf]
    %v670 = vld [vmem:[#allocation8 + $0x130] sm:$0xf]
    %v671 = vld [vmem:[#allocation8 + $0x134] sm:$0xf]
    %v672 = vld [vmem:[#allocation8 + $0x138] sm:$0xf]
    %v673 = vld [vmem:[#allocation8 + $0x13c] sm:$0xf]
    %v674 = vld [vmem:[#allocation8 + $0x140] sm:$0xf]
    %v675 = vld [vmem:[#allocation8 + $0x144] sm:$0xf]
    %v676 = vld [vmem:[#allocation8 + $0x148] sm:$0xf]
    %v677 = vld [vmem:[#allocation8 + $0x14c] sm:$0xf]
    %v678 = vld [vmem:[#allocation8 + $0x150] sm:$0xf]
    %v679 = vld [vmem:[#allocation8 + $0x154] sm:$0xf]
    %v680 = vld [vmem:[#allocation8 + $0x158] sm:$0xf]
    %v681 = vld [vmem:[#allocation8 + $0x15c] sm:$0xf]
    %v682 = vld [vmem:[#allocation8 + $0x160] sm:$0xf]
    %v683 = vld [vmem:[#allocation8 + $0x164] sm:$0xf]
    %v684 = vld [vmem:[#allocation8 + $0x168] sm:$0xf]
    %v685 = vld [vmem:[#allocation8 + $0x16c] sm:$0xf]
    %v686 = vld [vmem:[#allocation8 + $0x170] sm:$0xf]
    %v687 = vld [vmem:[#allocation8 + $0x174] sm:$0xf]
    %v688 = vld [vmem:[#allocation8 + $0x178] sm:$0xf]
    %v689 = vld [vmem:[#allocation8 + $0x17c] sm:$0xf]
    %v722 = vunpack.c.l.b16 %v658
    %v723 = vunpack.c.l.b16 %v659
    %v724 = vunpack.c.l.b16 %v660
    %v725 = vunpack.c.l.b16 %v661
    %v726 = vunpack.c.l.b16 %v662
    %v727 = vunpack.c.l.b16 %v663
    %v728 = vunpack.c.l.b16 %v664
    %v729 = vunpack.c.l.b16 %v665
    %v730 = vunpack.c.l.b16 %v666
    %v731 = vunpack.c.l.b16 %v667
    %v732 = vunpack.c.l.b16 %v668
    %v733 = vunpack.c.l.b16 %v669
    %v734 = vunpack.c.l.b16 %v670
    %v735 = vunpack.c.l.b16 %v671
    %v736 = vunpack.c.l.b16 %v672
    %v737 = vunpack.c.l.b16 %v673
    %v738 = vunpack.c.l.b16 %v674
    %v739 = vunpack.c.l.b16 %v675
    %v740 = vunpack.c.l.b16 %v676
    %v741 = vunpack.c.l.b16 %v677
    %v742 = vunpack.c.l.b16 %v678
    %v743 = vunpack.c.l.b16 %v679
    %v744 = vunpack.c.l.b16 %v680
    %v745 = vunpack.c.l.b16 %v681
    %v746 = vunpack.c.l.b16 %v682
    %v747 = vunpack.c.l.b16 %v683
    %v748 = vunpack.c.l.b16 %v684
    %v749 = vunpack.c.l.b16 %v685
    %v750 = vunpack.c.l.b16 %v686
    %v751 = vunpack.c.l.b16 %v687
    %v752 = vunpack.c.l.b16 %v688
    %v753 = vunpack.c.l.b16 %v689
    %v754 = vpack.c.b16 %v723, %v722
    %v755 = vpack.c.b16 %v725, %v724
    %v756 = vpack.c.b16 %v727, %v726
    %v757 = vpack.c.b16 %v729, %v728
    %v758 = vpack.c.b16 %v731, %v730
    %v759 = vpack.c.b16 %v733, %v732
    %v760 = vpack.c.b16 %v735, %v734
    %v761 = vpack.c.b16 %v737, %v736
    %v762 = vpack.c.b16 %v739, %v738
    %v763 = vpack.c.b16 %v741, %v740
    %v764 = vpack.c.b16 %v743, %v742
    %v765 = vpack.c.b16 %v745, %v744
    %v766 = vpack.c.b16 %v747, %v746
    %v767 = vpack.c.b16 %v749, %v748
    %v768 = vpack.c.b16 %v751, %v750
    %v769 = vpack.c.b16 %v753, %v752
    %786 = vmatprep.subr.bf16.mxu0 0
    %787 = vmatpush1.bf16.msra.mxu0 %v754
    %788 = vmatprep.subr.bf16.mxu0 0
    %789 = vmatpush1.bf16.msra.mxu0 %v755
    %790 = vmatprep.subr.bf16.mxu0 0
    %791 = vmatpush1.bf16.msra.mxu0 %v756
    %792 = vmatprep.subr.bf16.mxu0 0
    %793 = vmatpush1.bf16.msra.mxu0 %v757
    %794 = vmatprep.subr.bf16.mxu0 0
    %795 = vmatpush1.bf16.msra.mxu0 %v758
    %796 = vmatprep.subr.bf16.mxu0 0
    %797 = vmatpush1.bf16.msra.mxu0 %v759
    %798 = vmatprep.subr.bf16.mxu0 0
    %799 = vmatpush1.bf16.msra.mxu0 %v760
    %800 = vmatprep.subr.bf16.mxu0 0
    %801 = vmatpush1.bf16.msra.mxu0 %v761
    %802 = vmatprep.subr.bf16.mxu0 0
    %803 = vmatpush1.bf16.msra.mxu0 %v762
    %804 = vmatprep.subr.bf16.mxu0 0
    %805 = vmatpush1.bf16.msra.mxu0 %v763
    %806 = vmatprep.subr.bf16.mxu0 0
    %807 = vmatpush1.bf16.msra.mxu0 %v764
    %808 = vmatprep.subr.bf16.mxu0 0
    %809 = vmatpush1.bf16.msra.mxu0 %v765
    %810 = vmatprep.subr.bf16.mxu0 0
    %811 = vmatpush1.bf16.msra.mxu0 %v766
    %812 = vmatprep.subr.bf16.mxu0 0
    %813 = vmatpush1.bf16.msra.mxu0 %v767
    %814 = vmatprep.subr.bf16.mxu0 0
    %815 = vmatpush1.bf16.msra.mxu0 %v768
    %816 = vmatprep.subr.bf16.mxu0 0
    %817 = vmatpush1.bf16.msra.mxu0 %v769
    %818 = vmatprep.mubr.bf16.mxu0 %v657
    %819 = vmatmul.mubr.bf16.gmra.mrb[0].mxu0 %v656
    %v820 = vpop.f32.mrb[0].mxu0
    %v821 = vadd.f32 0.0, %v820
    %v822 = vpop.f32.mrb[0].mxu0
    %v823 = vpop.f32.mrb[0].mxu0
    %v824 = vpop.f32.mrb[0].mxu0
    %825 = vdwg.mxu0
    %v826 = vadd.f32 %v572, %v821
    %v827 = vld [vmem:[#allocation5 + $0x18] sm:$0xff]
    %v828 = vld [vmem:[#allocation5 + $0x38] sm:$0xff]
    %v829 = vld [vmem:[#allocation5 + $0x58] sm:$0xff]
    %v830 = vld [vmem:[#allocation5 + $0x78] sm:$0xff]
    %v831 = vld [vmem:[#allocation7 + $0x6] sm:$0x3]
    %v833 = vlaneseq
    %v834 = vshrl.u32 %v833, 7
    %v835 = vsub.s32 0, %v834
    %v836 = vrot.slane %v831, %v835
    %v837 = vlaneseq
    %v838 = vshrl.u32 %v837, 7
    %v839 = vsub.s32 1, %v838
    %v840 = vrot.slane %v831, %v839
    %v847 = vunpack.c.l.b16 %v827
    %v848 = vunpack.c.h.b16 %v827
    %v849 = vunpack.c.l.b16 %v828
    %v850 = vunpack.c.h.b16 %v828
    %v851 = vunpack.c.l.b16 %v829
    %v852 = vunpack.c.h.b16 %v829
    %v853 = vunpack.c.l.b16 %v830
    %v854 = vunpack.c.h.b16 %v830
    %v855 = vpack.c.b16 %v849, %v847
    %v856 = vpack.c.b16 %v850, %v848
    %v857 = vpack.c.b16 %v853, %v851
    %v858 = vpack.c.b16 %v854, %v852
    %863 = vmatprep.subr.bf16.mxu0 %v856
    %864 = vmatpush1.bf16.msra.mxu0 %v855
    %865 = vmatprep.subr.bf16.mxu0 %v858
    %866 = vmatpush1.bf16.msra.mxu0 %v857
    %867 = vmatprep.subr.bf16.mxu0 0
    %868 = vmatpush1.bf16.msra.mxu0 0
    %869 = vmatprep.subr.bf16.mxu0 0
    %870 = vmatpush1.bf16.msra.mxu0 0
    %871 = vmatprep.subr.bf16.mxu0 0
    %872 = vmatpush1.bf16.msra.mxu0 0
    %873 = vmatprep.subr.bf16.mxu0 0
    %874 = vmatpush1.bf16.msra.mxu0 0
    %875 = vmatprep.subr.bf16.mxu0 0
    %876 = vmatpush1.bf16.msra.mxu0 0
    %877 = vmatprep.subr.bf16.mxu0 0
    %878 = vmatpush1.bf16.msra.mxu0 0
    %879 = vmatprep.subr.bf16.mxu0 0
    %880 = vmatpush1.bf16.msra.mxu0 0
    %881 = vmatprep.subr.bf16.mxu0 0
    %882 = vmatpush1.bf16.msra.mxu0 0
    %883 = vmatprep.subr.bf16.mxu0 0
    %884 = vmatpush1.bf16.msra.mxu0 0
    %885 = vmatprep.subr.bf16.mxu0 0
    %886 = vmatpush1.bf16.msra.mxu0 0
    %887 = vmatprep.subr.bf16.mxu0 0
    %888 = vmatpush1.bf16.msra.mxu0 0
    %889 = vmatprep.subr.bf16.mxu0 0
    %890 = vmatpush1.bf16.msra.mxu0 0
    %891 = vmatprep.subr.bf16.mxu0 0
    %892 = vmatpush1.bf16.msra.mxu0 0
    %893 = vmatprep.subr.bf16.mxu0 0
    %894 = vmatpush1.bf16.msra.mxu0 0
    %895 = vmatprep.mubr.bf16.mxu0 0
    %896 = vmatmul.mubr.bf16.gmra.mrb[0].mxu0 %v113
    %v897 = vpop.f32.mrb[0].mxu0
    %v898 = vadd.f32 %v836, %v897
    %v899 = vpop.f32.mrb[0].mxu0
    %v900 = vadd.f32 %v840, %v899
    %v901 = vpop.f32.mrb[0].mxu0
    %v902 = vpop.f32.mrb[0].mxu0
    %903 = vdwg.mxu0
    %v904 = vmax.f32 %v898, 0.0
    %v905 = vmax.f32 %v900, 0.0
    %v906 = vpack.c.bf16 %v904, %v904
    %v907 = vpack.c.bf16 %v905, %v905
    %v908 = vld [vmem:[#allocation8 + $0x180] sm:$0xf]
    %v909 = vld [vmem:[#allocation8 + $0x184] sm:$0xf]
    %v910 = vld [vmem:[#allocation8 + $0x188] sm:$0xf]
    %v911 = vld [vmem:[#allocation8 + $0x18c] sm:$0xf]
    %v912 = vld [vmem:[#allocation8 + $0x190] sm:$0xf]
    %v913 = vld [vmem:[#allocation8 + $0x194] sm:$0xf]
    %v914 = vld [vmem:[#allocation8 + $0x198] sm:$0xf]
    %v915 = vld [vmem:[#allocation8 + $0x19c] sm:$0xf]
    %v916 = vld [vmem:[#allocation8 + $0x1a0] sm:$0xf]
    %v917 = vld [vmem:[#allocation8 + $0x1a4] sm:$0xf]
    %v918 = vld [vmem:[#allocation8 + $0x1a8] sm:$0xf]
    %v919 = vld [vmem:[#allocation8 + $0x1ac] sm:$0xf]
    %v920 = vld [vmem:[#allocation8 + $0x1b0] sm:$0xf]
    %v921 = vld [vmem:[#allocation8 + $0x1b4] sm:$0xf]
    %v922 = vld [vmem:[#allocation8 + $0x1b8] sm:$0xf]
    %v923 = vld [vmem:[#allocation8 + $0x1bc] sm:$0xf]
    %v924 = vld [vmem:[#allocation8 + $0x1c0] sm:$0xf]
    %v925 = vld [vmem:[#allocation8 + $0x1c4] sm:$0xf]
    %v926 = vld [vmem:[#allocation8 + $0x1c8] sm:$0xf]
    %v927 = vld [vmem:[#allocation8 + $0x1cc] sm:$0xf]
    %v928 = vld [vmem:[#allocation8 + $0x1d0] sm:$0xf]
    %v929 = vld [vmem:[#allocation8 + $0x1d4] sm:$0xf]
    %v930 = vld [vmem:[#allocation8 + $0x1d8] sm:$0xf]
    %v931 = vld [vmem:[#allocation8 + $0x1dc] sm:$0xf]
    %v932 = vld [vmem:[#allocation8 + $0x1e0] sm:$0xf]
    %v933 = vld [vmem:[#allocation8 + $0x1e4] sm:$0xf]
    %v934 = vld [vmem:[#allocation8 + $0x1e8] sm:$0xf]
    %v935 = vld [vmem:[#allocation8 + $0x1ec] sm:$0xf]
    %v936 = vld [vmem:[#allocation8 + $0x1f0] sm:$0xf]
    %v937 = vld [vmem:[#allocation8 + $0x1f4] sm:$0xf]
    %v938 = vld [vmem:[#allocation8 + $0x1f8] sm:$0xf]
    %v939 = vld [vmem:[#allocation8 + $0x1fc] sm:$0xf]
    %v972 = vunpack.c.l.b16 %v908
    %v973 = vunpack.c.l.b16 %v909
    %v974 = vunpack.c.l.b16 %v910
    %v975 = vunpack.c.l.b16 %v911
    %v976 = vunpack.c.l.b16 %v912
    %v977 = vunpack.c.l.b16 %v913
    %v978 = vunpack.c.l.b16 %v914
    %v979 = vunpack.c.l.b16 %v915
    %v980 = vunpack.c.l.b16 %v916
    %v981 = vunpack.c.l.b16 %v917
    %v982 = vunpack.c.l.b16 %v918
    %v983 = vunpack.c.l.b16 %v919
    %v984 = vunpack.c.l.b16 %v920
    %v985 = vunpack.c.l.b16 %v921
    %v986 = vunpack.c.l.b16 %v922
    %v987 = vunpack.c.l.b16 %v923
    %v988 = vunpack.c.l.b16 %v924
    %v989 = vunpack.c.l.b16 %v925
    %v990 = vunpack.c.l.b16 %v926
    %v991 = vunpack.c.l.b16 %v927
    %v992 = vunpack.c.l.b16 %v928
    %v993 = vunpack.c.l.b16 %v929
    %v994 = vunpack.c.l.b16 %v930
    %v995 = vunpack.c.l.b16 %v931
    %v996 = vunpack.c.l.b16 %v932
    %v997 = vunpack.c.l.b16 %v933
    %v998 = vunpack.c.l.b16 %v934
    %v999 = vunpack.c.l.b16 %v935
    %v1000 = vunpack.c.l.b16 %v936
    %v1001 = vunpack.c.l.b16 %v937
    %v1002 = vunpack.c.l.b16 %v938
    %v1003 = vunpack.c.l.b16 %v939
    %v1004 = vpack.c.b16 %v973, %v972
    %v1005 = vpack.c.b16 %v975, %v974
    %v1006 = vpack.c.b16 %v977, %v976
    %v1007 = vpack.c.b16 %v979, %v978
    %v1008 = vpack.c.b16 %v981, %v980
    %v1009 = vpack.c.b16 %v983, %v982
    %v1010 = vpack.c.b16 %v985, %v984
    %v1011 = vpack.c.b16 %v987, %v986
    %v1012 = vpack.c.b16 %v989, %v988
    %v1013 = vpack.c.b16 %v991, %v990
    %v1014 = vpack.c.b16 %v993, %v992
    %v1015 = vpack.c.b16 %v995, %v994
    %v1016 = vpack.c.b16 %v997, %v996
    %v1017 = vpack.c.b16 %v999, %v998
    %v1018 = vpack.c.b16 %v1001, %v1000
    %v1019 = vpack.c.b16 %v1003, %v1002
    %1036 = vmatprep.subr.bf16.mxu0 0
    %1037 = vmatpush1.bf16.msra.mxu0 %v1004
    %1038 = vmatprep.subr.bf16.mxu0 0
    %1039 = vmatpush1.bf16.msra.mxu0 %v1005
    %1040 = vmatprep.subr.bf16.mxu0 0
    %1041 = vmatpush1.bf16.msra.mxu0 %v1006
    %1042 = vmatprep.subr.bf16.mxu0 0
    %1043 = vmatpush1.bf16.msra.mxu0 %v1007
    %1044 = vmatprep.subr.bf16.mxu0 0
    %1045 = vmatpush1.bf16.msra.mxu0 %v1008
    %1046 = vmatprep.subr.bf16.mxu0 0
    %1047 = vmatpush1.bf16.msra.mxu0 %v1009
    %1048 = vmatprep.subr.bf16.mxu0 0
    %1049 = vmatpush1.bf16.msra.mxu0 %v1010
    %1050 = vmatprep.subr.bf16.mxu0 0
    %1051 = vmatpush1.bf16.msra.mxu0 %v1011
    %1052 = vmatprep.subr.bf16.mxu0 0
    %1053 = vmatpush1.bf16.msra.mxu0 %v1012
    %1054 = vmatprep.subr.bf16.mxu0 0
    %1055 = vmatpush1.bf16.msra.mxu0 %v1013
    %1056 = vmatprep.subr.bf16.mxu0 0
    %1057 = vmatpush1.bf16.msra.mxu0 %v1014
    %1058 = vmatprep.subr.bf16.mxu0 0
    %1059 = vmatpush1.bf16.msra.mxu0 %v1015
    %1060 = vmatprep.subr.bf16.mxu0 0
    %1061 = vmatpush1.bf16.msra.mxu0 %v1016
    %1062 = vmatprep.subr.bf16.mxu0 0
    %1063 = vmatpush1.bf16.msra.mxu0 %v1017
    %1064 = vmatprep.subr.bf16.mxu0 0
    %1065 = vmatpush1.bf16.msra.mxu0 %v1018
    %1066 = vmatprep.subr.bf16.mxu0 0
    %1067 = vmatpush1.bf16.msra.mxu0 %v1019
    %1068 = vmatprep.mubr.bf16.mxu0 %v907
    %1069 = vmatmul.mubr.bf16.gmra.mrb[0].mxu0 %v906
    %v1070 = vpop.f32.mrb[0].mxu0
    %v1071 = vadd.f32 0.0, %v1070
    %v1072 = vpop.f32.mrb[0].mxu0
    %v1073 = vpop.f32.mrb[0].mxu0
    %v1074 = vpop.f32.mrb[0].mxu0
    %1075 = vdwg.mxu0
    %v1076 = vadd.f32 %v826, %v1071
    %v1077 = vld [vmem:[%s4] sm:$0x1]
    %v1079 = vlaneseq
    %v1080 = vshrl.u32 %v1079, 7
    %v1081 = vsub.s32 0, %v1080
    %v1082 = vrot.slane %v1077, %v1081
    %v1084 = vadd.f32 %v1076, %v1082
    %1085 = vst [vmem:[#allocation10] sm:$0xff] %v1084
    // Predicated region
    $region38: #{tpu_custom_call.1} parent=1 // pred_check
      _
    $region39: #{tpu_custom_call.1} parent=1 // pred_check_branch
      %1087 = sbr.rel (0) target = $region41
    $region40: #{tpu_custom_call.1} parent=1 // pred_region
      %s1089 = ssub.s32 128, 128
      %1090 = vsyncadd [#allocation4], %s1089
      %s1092 = sshll.u32 [#allocation10], 4
      %s1093 = int_to_ptr.vmem [resolvable:$true] %s1092
      %1095 = dma.vmem_to_hbm [thread:$0]  %s1093, 128, %s5, [#allocation4]
    $region41: #{tpu_custom_call.1} parent=1 // pred_fallthru
      _
    // Predicated region
    $region42: #{tpu_custom_call.1} parent=1 // pred_check
      _
    $region43: #{tpu_custom_call.1} parent=1 // pred_check_branch
      %1097 = sbr.rel (0) target = $region45
    $region44: #{tpu_custom_call.1} parent=1 // pred_region
      %1098 = dma.done [#allocation4], 128
    $region45: #{tpu_custom_call.1} parent=1 // pred_fallthru
      _
    %1099 = vsyncpa [#allocation3], 1
    %1100 = vsyncpa [#allocation6], 1
    %1101 = vsyncpa [#allocation9], 1
    %1102 = vsyncpa [#allocation4], 1

</llo_original>
